<compile_context>
chip_gen: v7x
topology: tpu7x:2x2x1
jax: 0.10.0
libtpu: 0.0.40
codegen_flags: <defaults>
</compile_context>

<pallas_src>
import functools

import jax
import jax.numpy as jnp
from jax import lax
from jax.experimental import pallas as pl
from jax.experimental.pallas import tpu as pltpu

NUM_HEADS = 4
LANE = 128


def _round_up(x, m):
    return (x + m - 1) // m * m


def _mhca_kernel(gamma_ref, t2_ref, t1_ref, wq_ref, wkv_ref, wp_ref, bp_ref,
                 out_ref, *, num_heads, head_dim, c_valid, scale):
    """One batch element per grid step. All matmuls are bf16 x bf16 -> f32."""
    H, d, C = num_heads, head_dim, c_valid
    f32, bf16 = jnp.float32, jnp.bfloat16

    x2 = t2_ref[0]                       # (N, Cp) bf16 -- t2_grad (padded C)
    x1 = t1_ref[0]                       # (N, Cp) bf16 -- t1
    N, Cp = x2.shape

    # ---- fused full-width projections (contraction Cp, full MXU columns) ----
    q_full = jnp.dot(x2, wq_ref[...], preferred_element_type=f32)     # (N, Cp)
    kv = jnp.dot(x1, wkv_ref[...], preferred_element_type=f32)        # (N, 2Cp)

    # ---- split heads: stack head-major along rows, at the TRUE head dim d ----
    # One static lane-slice per head per tensor; afterwards all per-head views
    # are sublane (row) slices, which are cheap and tile-aligned.
    q_stack = jnp.concatenate(
        [q_full[:, h * d:(h + 1) * d] for h in range(H)], axis=0)      # (H*N, d) f32
    k_stack = jnp.concatenate(
        [kv[:, h * d:(h + 1) * d] for h in range(H)], axis=0)          # (H*N, d)
    v_stack = jnp.concatenate(
        [kv[:, Cp + h * d:Cp + (h + 1) * d] for h in range(H)], axis=0)

    # Fold 1/sqrt(d) into q's bf16 score copy; the residual keeps unscaled q.
    qs = (q_stack * scale).astype(bf16)
    kb = k_stack.astype(bf16)
    vb = v_stack.astype(bf16)

    # ---- per-head scaled-dot-product attention (one stacked softmax) ----
    s = jnp.concatenate(
        [lax.dot_general(qs[h * N:(h + 1) * N], kb[h * N:(h + 1) * N],
                         (((1,), (1,)), ((), ())),
                         preferred_element_type=f32)
         for h in range(H)], axis=0)                                    # (H*N, N) f32
    s_max = jnp.max(s, axis=-1, keepdims=True)
    p = jnp.exp(s - s_max)
    attn = (p * pl.reciprocal(jnp.sum(p, axis=-1, keepdims=True), approx=True)
            ).astype(bf16)
    xo_flat = jnp.concatenate(
        [jnp.dot(attn[h * N:(h + 1) * N], vb[h * N:(h + 1) * N],
                 preferred_element_type=f32)
         for h in range(H)], axis=0)                                    # (H*N, d) f32

    # ---- LAM_Module over the stacked heads (true d -> no padding masks) ----
    xo_b = xo_flat.astype(bf16)
    energy = lax.dot_general(xo_b, xo_b, (((0,), (0,)), ((), ())),
                             preferred_element_type=f32)                # (d, d)
    # Faithful to PyTorch: softmax(energy) — its `energy_new` is unused.
    e_max = jnp.max(energy, axis=-1, keepdims=True)
    e = jnp.exp(energy - e_max)
    lam = (e * pl.reciprocal(jnp.sum(e, axis=-1, keepdims=True), approx=True)
           ).astype(bf16)
    lam_out = lax.dot_general(xo_b, lam, (((1,), (1,)), ((), ())),
                              preferred_element_type=f32)               # (H*N, d)
    combo = gamma_ref[0] * lam_out + xo_flat + q_stack                  # (H*N, d) f32

    # ---- back to (N, C) interleaved layout + residual + ONE output proj ----
    pieces = [combo[h * N:(h + 1) * N, :] for h in range(H)]            # H x (N, d)
    if Cp > C:
        pieces.append(jnp.zeros((N, Cp - C), f32))
    combo_nc = jnp.concatenate(pieces, axis=1)                          # (N, Cp)
    xsum = (x2.astype(f32) + combo_nc).astype(bf16)                     # t2 + x_other
    out = jnp.dot(xsum, wp_ref[...], preferred_element_type=f32) + bp_ref[...]
    out_ref[0] = out.astype(out_ref.dtype)                              # bf16, lane-dense


def _vmem_limit_bytes(N, Cp, H, d):
    """Footprint-based scoped-VMEM request, capped below v7x's 64 MiB."""
    bf, f4 = 2, 4
    weights = (Cp * Cp + Cp * 2 * Cp + Cp * Cp) * bf        # Wq, Wkv, Wp (per buffer)
    io_blocks = 3 * N * Cp * bf                              # t2, t1, out (per buffer)
    interm = (4 * N * Cp * f4                                # q_full, kv
              + 2 * H * N * N * f4                           # scores + probs
              + 8 * H * N * d * f4)                          # stacked q/k/v/xo/combo
    est = 2 * (weights + io_blocks) + interm + (4 << 20)     # double buffers + headroom
    return int(min(48 << 20, max(32 << 20, est)))


def multi_head_cross_attention(t2_grad, t1, wq_t, wkv_t, wp_t, bp, gamma,
                               num_heads=NUM_HEADS):
    B, N, C = t2_grad.shape
    H = num_heads
    assert C % H == 0, "channels must divide by num_heads"
    assert N % 8 == 0, "token count must be a multiple of 8 (sublane tile)"
    d = C // H
    Cp = _round_up(C, LANE)              # pad ONLY the stacked-channel axis
    bf16, f32 = jnp.bfloat16, jnp.float32

    t2_p = jnp.pad(t2_grad, ((0, 0), (0, 0), (0, Cp - C))).astype(bf16)
    t1_p = jnp.pad(t1, ((0, 0), (0, 0), (0, Cp - C))).astype(bf16)

    def pad_w(w):                        # (C, C) -> (Cp, Cp), zero padded
        return jnp.pad(w, ((0, Cp - C), (0, Cp - C))).astype(bf16)

    wq_p = pad_w(wq_t)                                                  # (Cp, Cp)
    wkv_p = jnp.concatenate([pad_w(wkv_t[:, :C]), pad_w(wkv_t[:, C:])],
                            axis=1)                                     # (Cp, 2Cp)
    wp_p = pad_w(wp_t)                                                  # (Cp, Cp)
    bp_p = jnp.pad(bp, (0, Cp - C)).astype(f32).reshape(1, Cp)
    gamma_s = gamma.reshape(1).astype(f32)

    kernel = functools.partial(_mhca_kernel, num_heads=H, head_dim=d,
                               c_valid=C, scale=float(d) ** -0.5)

    out_p = pl.pallas_call(
        kernel,
        out_shape=jax.ShapeDtypeStruct((B, N, Cp), jnp.bfloat16),
        grid_spec=pltpu.PrefetchScalarGridSpec(
            num_scalar_prefetch=0,
            grid=(B,),
            in_specs=[
                # gamma: a single scalar — keep it in SMEM, not a VMEM tile.
                pl.BlockSpec(memory_space=pltpu.MemorySpace.SMEM),
                pl.BlockSpec((1, N, Cp), lambda b: (b, 0, 0)),     # t2_grad
                pl.BlockSpec((1, N, Cp), lambda b: (b, 0, 0)),     # t1
                # Constant-index weight blocks: fetched once across the grid.
                # (Switch to pipeline_mode=pl.Buffered(1) to single-buffer them
                #  if C ever grows enough for the double buffer to matter.)
                pl.BlockSpec((Cp, Cp), lambda b: (0, 0)),          # Wq
                pl.BlockSpec((Cp, 2 * Cp), lambda b: (0, 0)),      # Wk | Wv fused
                pl.BlockSpec((Cp, Cp), lambda b: (0, 0)),          # Wp (single copy)
                pl.BlockSpec((1, Cp), lambda b: (0, 0)),           # proj bias
            ],
            out_specs=pl.BlockSpec((1, N, Cp), lambda b: (b, 0, 0)),
        ),
        compiler_params=pltpu.CompilerParams(
            dimension_semantics=("parallel",),
            vmem_limit_bytes=_vmem_limit_bytes(N, Cp, H, d),
        ),
    )(gamma_s, t2_p, t1_p, wq_p, wkv_p, wp_p, bp_p)
    # TODO(synk): add a query-tile grid axis (requires a two-pass LAM, since
    # `energy` couples all H*N positions) so v7x's second TensorCore gets work
    # when B == 1 and the (H*N, N) score block stays within VMEM at large N.
    return out_p[..., :C]


def reference(t2, t1, wq_t, wkv_t, wp_t, bp, gamma, num_heads=NUM_HEADS):
    """Pure-JAX mirror of the PyTorch forward, using the same mixed-precision
    policy as the kernel (bf16 matmul operands, f32 accumulation, f32 softmax,
    single fused output projection on t2 + x_other)."""
    B, N, C = t2.shape
    H = num_heads
    d = C // H
    scale = float(d) ** -0.5
    bf, f32 = jnp.bfloat16, jnp.float32
    t2b, t1b = t2.astype(bf), t1.astype(bf)

    q = jnp.einsum('bnc,cd->bnd', t2b, wq_t.astype(bf), preferred_element_type=f32)
    kv = jnp.einsum('bnc,ck->bnk', t1b, wkv_t.astype(bf), preferred_element_type=f32)
    k, v = kv[..., :C], kv[..., C:]
    qh = q.reshape(B, N, H, d).transpose(0, 2, 1, 3)          # (B,H,N,d) f32
    kh = k.reshape(B, N, H, d).transpose(0, 2, 1, 3)
    vh = v.reshape(B, N, H, d).transpose(0, 2, 1, 3)

    s = jnp.einsum('bhnd,bhmd->bhnm', (qh * scale).astype(bf), kh.astype(bf),
                   preferred_element_type=f32)
    attn = jax.nn.softmax(s, axis=-1)
    xo = jnp.einsum('bhnm,bhmd->bhnd', attn.astype(bf), vh.astype(bf),
                    preferred_element_type=f32)               # (B,H,N,d) f32

    # LAM_Module (PyTorch softmaxes `energy` itself; energy_new is unused)
    xo_flat = xo.reshape(B, H * N, d)
    xob = xo_flat.astype(bf)
    energy = jnp.einsum('bpi,bpj->bij', xob, xob, preferred_element_type=f32)
    lam = jax.nn.softmax(energy, axis=-1)
    lam_out = jnp.einsum('bpj,bij->bpi', xob, lam.astype(bf),
                         preferred_element_type=f32)
    lam_res = gamma[0] * lam_out + xo_flat                    # (B, H*N, d)

    combo = lam_res.reshape(B, H, N, d) + qh                  # + unscaled q
    combo_flat = combo.transpose(0, 2, 1, 3).reshape(B, N, C)
    xsum = (t2b.astype(f32) + combo_flat).astype(bf)          # t2 + x_other
    out = jnp.einsum('bnc,cm->bnm', xsum, wp_t.astype(bf),
                     preferred_element_type=f32) + bp
    return out


if __name__ == "__main__":
    B, N, C = 2, 16, 32
    H = NUM_HEADS

    key = jax.random.PRNGKey(0)
    k1, k2, k3, k4, k5, k6 = jax.random.split(key, 6)

    t2_grad = jax.random.normal(k1, (B, N, C), jnp.float32)
    t1 = jax.random.normal(k2, (B, N, C), jnp.float32)

    # PyTorch stores Linear weights as (out, in); pass the transpose (x @ W^T).
    wq = jax.random.normal(k3, (C, C), jnp.float32) * (C ** -0.5)
    wkv = jax.random.normal(k4, (2 * C, C), jnp.float32) * (C ** -0.5)
    wp = jax.random.normal(k5, (C, C), jnp.float32) * (C ** -0.5)
    bp = jax.random.normal(k6, (C,), jnp.float32) * 0.01
    # Module initializes gamma to zeros; use a nonzero value so the LAM branch
    # actually contributes to the output.
    gamma = jnp.array([0.5], jnp.float32)

    out = multi_head_cross_attention(t2_grad, t1, wq.T, wkv.T, wp.T, bp, gamma)
    out = jax.block_until_ready(out)

    ref = reference(t2_grad, t1, wq.T, wkv.T, wp.T, bp, gamma)
    assert out.shape == (B, N, C)
    out_f32 = out.astype(jnp.float32)
    max_err = float(jnp.max(jnp.abs(out_f32 - ref)))
    assert jnp.allclose(out_f32, ref, rtol=2e-2, atol=2e-2), (
        f"mismatch vs JAX reference, max|err|={max_err}")

    print("KERNEL_OK")
</pallas_src>

<mosaic_0001>
module attributes {stable_mosaic.version = 11 : i64} {
  func.func @_mhca_kernel(%arg0: i32, %arg1: memref<1xf32, #tpu.memory_space<smem>>, %arg2: memref<1x16x128xbf16, #tpu.memory_space<vmem>>, %arg3: memref<1x16x128xbf16, #tpu.memory_space<vmem>>, %arg4: memref<128x128xbf16, #tpu.memory_space<vmem>>, %arg5: memref<128x256xbf16, #tpu.memory_space<vmem>>, %arg6: memref<128x128xbf16, #tpu.memory_space<vmem>>, %arg7: memref<1x128xf32, #tpu.memory_space<vmem>>, %arg8: memref<1x16x128xbf16, #tpu.memory_space<vmem>>) attributes {dimension_semantics = [#tpu.dimension_semantics<parallel>], iteration_bounds = array<i64: 2>, scalar_prefetch = 0 : i64, scratch_operands = 0 : i64, tpu.core_type = #tpu.core_type<tc>, window_params = [{transform_indices = @transform_0, window_bounds = array<i64: 1>}, {transform_indices = @transform_1, window_bounds = array<i64: 1, 16, 128>}, {transform_indices = @transform_2, window_bounds = array<i64: 1, 16, 128>}, {pipeline_mode = #tpu.pipeline_mode<synchronous>, transform_indices = @transform_3, window_bounds = array<i64: 128, 128>}, {pipeline_mode = #tpu.pipeline_mode<synchronous>, transform_indices = @transform_4, window_bounds = array<i64: 128, 256>}, {pipeline_mode = #tpu.pipeline_mode<synchronous>, transform_indices = @transform_5, window_bounds = array<i64: 128, 128>}, {pipeline_mode = #tpu.pipeline_mode<synchronous>, transform_indices = @transform_6, window_bounds = array<i64: 1, 128>}, {transform_indices = @transform_7, window_bounds = array<i64: 1, 16, 128>}]} {
    %c0 = arith.constant 0 : index
    %c0_0 = arith.constant 0 : index
    %c0_1 = arith.constant 0 : index
    %0 = vector.load %arg2[%c0, %c0_0, %c0_1] : memref<1x16x128xbf16, #tpu.memory_space<vmem>>, vector<1x16x128xbf16>
    %1 = vector.shape_cast %0 : vector<1x16x128xbf16> to vector<16x128xbf16>
    %c0_2 = arith.constant 0 : index
    %c0_3 = arith.constant 0 : index
    %c0_4 = arith.constant 0 : index
    %2 = vector.load %arg3[%c0_2, %c0_3, %c0_4] : memref<1x16x128xbf16, #tpu.memory_space<vmem>>, vector<1x16x128xbf16>
    %3 = vector.shape_cast %2 : vector<1x16x128xbf16> to vector<16x128xbf16>
    %c0_5 = arith.constant 0 : index
    %c0_6 = arith.constant 0 : index
    %4 = vector.load %arg4[%c0_5, %c0_6] : memref<128x128xbf16, #tpu.memory_space<vmem>>, vector<128x128xbf16>
    %cst = arith.constant dense<0.000000e+00> : vector<16x128xf32>
    %5 = tpu.matmul %1, %4, %cst {dimension_numbers = #tpu.dot_dimension_numbers<[1], [0], [0], [1], [0, 0, 1, 1], [], []>} : vector<16x128xbf16>, vector<128x128xbf16>, vector<16x128xf32> -> vector<16x128xf32>
    %c0_7 = arith.constant 0 : index
    %c0_8 = arith.constant 0 : index
    %6 = vector.load %arg5[%c0_7, %c0_8] : memref<128x256xbf16, #tpu.memory_space<vmem>>, vector<128x256xbf16>
    %cst_9 = arith.constant dense<0.000000e+00> : vector<16x256xf32>
    %7 = tpu.matmul %3, %6, %cst_9 {dimension_numbers = #tpu.dot_dimension_numbers<[1], [0], [0], [1], [0, 0, 1, 1], [], []>} : vector<16x128xbf16>, vector<128x256xbf16>, vector<16x256xf32> -> vector<16x256xf32>
    %8 = vector.extract_strided_slice %5 {offsets = [0, 0], sizes = [16, 8], strides = [1, 1]} : vector<16x128xf32> to vector<16x8xf32>
    %9 = vector.extract_strided_slice %5 {offsets = [0, 8], sizes = [16, 8], strides = [1, 1]} : vector<16x128xf32> to vector<16x8xf32>
    %10 = vector.extract_strided_slice %5 {offsets = [0, 16], sizes = [16, 8], strides = [1, 1]} : vector<16x128xf32> to vector<16x8xf32>
    %11 = vector.extract_strided_slice %5 {offsets = [0, 24], sizes = [16, 8], strides = [1, 1]} : vector<16x128xf32> to vector<16x8xf32>
    %12 = tpu.concatenate %8, %9, %10, %11 in 0 : vector<16x8xf32>, vector<16x8xf32>, vector<16x8xf32>, vector<16x8xf32> -> vector<64x8xf32>
    %13 = vector.extract_strided_slice %7 {offsets = [0, 0], sizes = [16, 8], strides = [1, 1]} : vector<16x256xf32> to vector<16x8xf32>
    %14 = vector.extract_strided_slice %7 {offsets = [0, 8], sizes = [16, 8], strides = [1, 1]} : vector<16x256xf32> to vector<16x8xf32>
    %15 = vector.extract_strided_slice %7 {offsets = [0, 16], sizes = [16, 8], strides = [1, 1]} : vector<16x256xf32> to vector<16x8xf32>
    %16 = vector.extract_strided_slice %7 {offsets = [0, 24], sizes = [16, 8], strides = [1, 1]} : vector<16x256xf32> to vector<16x8xf32>
    %17 = tpu.concatenate %13, %14, %15, %16 in 0 : vector<16x8xf32>, vector<16x8xf32>, vector<16x8xf32>, vector<16x8xf32> -> vector<64x8xf32>
    %18 = vector.extract_strided_slice %7 {offsets = [0, 128], sizes = [16, 8], strides = [1, 1]} : vector<16x256xf32> to vector<16x8xf32>
    %19 = vector.extract_strided_slice %7 {offsets = [0, 136], sizes = [16, 8], strides = [1, 1]} : vector<16x256xf32> to vector<16x8xf32>
    %20 = vector.extract_strided_slice %7 {offsets = [0, 144], sizes = [16, 8], strides = [1, 1]} : vector<16x256xf32> to vector<16x8xf32>
    %21 = vector.extract_strided_slice %7 {offsets = [0, 152], sizes = [16, 8], strides = [1, 1]} : vector<16x256xf32> to vector<16x8xf32>
    %22 = tpu.concatenate %18, %19, %20, %21 in 0 : vector<16x8xf32>, vector<16x8xf32>, vector<16x8xf32>, vector<16x8xf32> -> vector<64x8xf32>
    %cst_10 = arith.constant 0.353553385 : f32
    %23 = vector.broadcast %cst_10 : f32 to vector<64x8xf32>
    %24 = arith.mulf %12, %23 : vector<64x8xf32>
    %25 = arith.truncf %24 : vector<64x8xf32> to vector<64x8xbf16>
    %26 = arith.truncf %17 : vector<64x8xf32> to vector<64x8xbf16>
    %27 = arith.truncf %22 : vector<64x8xf32> to vector<64x8xbf16>
    %28 = vector.extract_strided_slice %25 {offsets = [0, 0], sizes = [16, 8], strides = [1, 1]} : vector<64x8xbf16> to vector<16x8xbf16>
    %29 = vector.extract_strided_slice %26 {offsets = [0, 0], sizes = [16, 8], strides = [1, 1]} : vector<64x8xbf16> to vector<16x8xbf16>
    %cst_11 = arith.constant dense<0.000000e+00> : vector<16x16xf32>
    %30 = tpu.matmul %28, %29, %cst_11 {dimension_numbers = #tpu.dot_dimension_numbers<[1], [1], [0], [0], [0, 0, 1, 0], [], []>} : vector<16x8xbf16>, vector<16x8xbf16>, vector<16x16xf32> -> vector<16x16xf32>
    %31 = vector.extract_strided_slice %25 {offsets = [16, 0], sizes = [16, 8], strides = [1, 1]} : vector<64x8xbf16> to vector<16x8xbf16>
    %32 = vector.extract_strided_slice %26 {offsets = [16, 0], sizes = [16, 8], strides = [1, 1]} : vector<64x8xbf16> to vector<16x8xbf16>
    %cst_12 = arith.constant dense<0.000000e+00> : vector<16x16xf32>
    %33 = tpu.matmul %31, %32, %cst_12 {dimension_numbers = #tpu.dot_dimension_numbers<[1], [1], [0], [0], [0, 0, 1, 0], [], []>} : vector<16x8xbf16>, vector<16x8xbf16>, vector<16x16xf32> -> vector<16x16xf32>
    %34 = vector.extract_strided_slice %25 {offsets = [32, 0], sizes = [16, 8], strides = [1, 1]} : vector<64x8xbf16> to vector<16x8xbf16>
    %35 = vector.extract_strided_slice %26 {offsets = [32, 0], sizes = [16, 8], strides = [1, 1]} : vector<64x8xbf16> to vector<16x8xbf16>
    %cst_13 = arith.constant dense<0.000000e+00> : vector<16x16xf32>
    %36 = tpu.matmul %34, %35, %cst_13 {dimension_numbers = #tpu.dot_dimension_numbers<[1], [1], [0], [0], [0, 0, 1, 0], [], []>} : vector<16x8xbf16>, vector<16x8xbf16>, vector<16x16xf32> -> vector<16x16xf32>
    %37 = vector.extract_strided_slice %25 {offsets = [48, 0], sizes = [16, 8], strides = [1, 1]} : vector<64x8xbf16> to vector<16x8xbf16>
    %38 = vector.extract_strided_slice %26 {offsets = [48, 0], sizes = [16, 8], strides = [1, 1]} : vector<64x8xbf16> to vector<16x8xbf16>
    %cst_14 = arith.constant dense<0.000000e+00> : vector<16x16xf32>
    %39 = tpu.matmul %37, %38, %cst_14 {dimension_numbers = #tpu.dot_dimension_numbers<[1], [1], [0], [0], [0, 0, 1, 0], [], []>} : vector<16x8xbf16>, vector<16x8xbf16>, vector<16x16xf32> -> vector<16x16xf32>
    %40 = tpu.concatenate %30, %33, %36, %39 in 0 : vector<16x16xf32>, vector<16x16xf32>, vector<16x16xf32>, vector<16x16xf32> -> vector<64x16xf32>
    %cst_15 = arith.constant dense<0xFF800000> : vector<64xf32>
    %41 = vector.multi_reduction <maximumf>, %40, %cst_15 [1] : vector<64x16xf32> to vector<64xf32>
    %42 = vector.shape_cast %41 : vector<64xf32> to vector<64x1xf32>
    %43 = vector.broadcast %42 : vector<64x1xf32> to vector<64x16xf32>
    %44 = arith.subf %40, %43 : vector<64x16xf32>
    %45 = math.exp %44 : vector<64x16xf32>
    %cst_16 = arith.constant dense<0.000000e+00> : vector<64xf32>
    %46 = vector.multi_reduction <add>, %45, %cst_16 [1] : vector<64x16xf32> to vector<64xf32>
    %47 = vector.shape_cast %46 : vector<64xf32> to vector<64x1xf32>
    %48 = tpu.reciprocal %47 {approx = true} : vector<64x1xf32> -> vector<64x1xf32>
    %49 = vector.broadcast %48 : vector<64x1xf32> to vector<64x16xf32>
    %50 = arith.mulf %45, %49 : vector<64x16xf32>
    %51 = arith.truncf %50 : vector<64x16xf32> to vector<64x16xbf16>
    %52 = vector.extract_strided_slice %51 {offsets = [0, 0], sizes = [16, 16], strides = [1, 1]} : vector<64x16xbf16> to vector<16x16xbf16>
    %53 = vector.extract_strided_slice %27 {offsets = [0, 0], sizes = [16, 8], strides = [1, 1]} : vector<64x8xbf16> to vector<16x8xbf16>
    %cst_17 = arith.constant dense<0.000000e+00> : vector<16x8xf32>
    %54 = tpu.matmul %52, %53, %cst_17 {dimension_numbers = #tpu.dot_dimension_numbers<[1], [0], [0], [1], [0, 0, 1, 1], [], []>} : vector<16x16xbf16>, vector<16x8xbf16>, vector<16x8xf32> -> vector<16x8xf32>
    %55 = vector.extract_strided_slice %51 {offsets = [16, 0], sizes = [16, 16], strides = [1, 1]} : vector<64x16xbf16> to vector<16x16xbf16>
    %56 = vector.extract_strided_slice %27 {offsets = [16, 0], sizes = [16, 8], strides = [1, 1]} : vector<64x8xbf16> to vector<16x8xbf16>
    %cst_18 = arith.constant dense<0.000000e+00> : vector<16x8xf32>
    %57 = tpu.matmul %55, %56, %cst_18 {dimension_numbers = #tpu.dot_dimension_numbers<[1], [0], [0], [1], [0, 0, 1, 1], [], []>} : vector<16x16xbf16>, vector<16x8xbf16>, vector<16x8xf32> -> vector<16x8xf32>
    %58 = vector.extract_strided_slice %51 {offsets = [32, 0], sizes = [16, 16], strides = [1, 1]} : vector<64x16xbf16> to vector<16x16xbf16>
    %59 = vector.extract_strided_slice %27 {offsets = [32, 0], sizes = [16, 8], strides = [1, 1]} : vector<64x8xbf16> to vector<16x8xbf16>
    %cst_19 = arith.constant dense<0.000000e+00> : vector<16x8xf32>
    %60 = tpu.matmul %58, %59, %cst_19 {dimension_numbers = #tpu.dot_dimension_numbers<[1], [0], [0], [1], [0, 0, 1, 1], [], []>} : vector<16x16xbf16>, vector<16x8xbf16>, vector<16x8xf32> -> vector<16x8xf32>
    %61 = vector.extract_strided_slice %51 {offsets = [48, 0], sizes = [16, 16], strides = [1, 1]} : vector<64x16xbf16> to vector<16x16xbf16>
    %62 = vector.extract_strided_slice %27 {offsets = [48, 0], sizes = [16, 8], strides = [1, 1]} : vector<64x8xbf16> to vector<16x8xbf16>
    %cst_20 = arith.constant dense<0.000000e+00> : vector<16x8xf32>
    %63 = tpu.matmul %61, %62, %cst_20 {dimension_numbers = #tpu.dot_dimension_numbers<[1], [0], [0], [1], [0, 0, 1, 1], [], []>} : vector<16x16xbf16>, vector<16x8xbf16>, vector<16x8xf32> -> vector<16x8xf32>
    %64 = tpu.concatenate %54, %57, %60, %63 in 0 : vector<16x8xf32>, vector<16x8xf32>, vector<16x8xf32>, vector<16x8xf32> -> vector<64x8xf32>
    %65 = arith.truncf %64 : vector<64x8xf32> to vector<64x8xbf16>
    %cst_21 = arith.constant dense<0.000000e+00> : vector<8x8xf32>
    %66 = tpu.matmul %65, %65, %cst_21 {dimension_numbers = #tpu.dot_dimension_numbers<[0], [0], [1], [1], [0, 1, 1, 1], [], []>} : vector<64x8xbf16>, vector<64x8xbf16>, vector<8x8xf32> -> vector<8x8xf32>
    %cst_22 = arith.constant dense<0xFF800000> : vector<8xf32>
    %67 = vector.multi_reduction <maximumf>, %66, %cst_22 [1] : vector<8x8xf32> to vector<8xf32>
    %68 = vector.shape_cast %67 : vector<8xf32> to vector<8x1xf32>
    %69 = vector.broadcast %68 : vector<8x1xf32> to vector<8x8xf32>
    %70 = arith.subf %66, %69 : vector<8x8xf32>
    %71 = math.exp %70 : vector<8x8xf32>
    %cst_23 = arith.constant dense<0.000000e+00> : vector<8xf32>
    %72 = vector.multi_reduction <add>, %71, %cst_23 [1] : vector<8x8xf32> to vector<8xf32>
    %73 = vector.shape_cast %72 : vector<8xf32> to vector<8x1xf32>
    %74 = tpu.reciprocal %73 {approx = true} : vector<8x1xf32> -> vector<8x1xf32>
    %75 = vector.broadcast %74 : vector<8x1xf32> to vector<8x8xf32>
    %76 = arith.mulf %71, %75 : vector<8x8xf32>
    %77 = arith.truncf %76 : vector<8x8xf32> to vector<8x8xbf16>
    %cst_24 = arith.constant dense<0.000000e+00> : vector<64x8xf32>
    %78 = tpu.matmul %65, %77, %cst_24 {dimension_numbers = #tpu.dot_dimension_numbers<[1], [1], [0], [0], [0, 0, 1, 0], [], []>} : vector<64x8xbf16>, vector<8x8xbf16>, vector<64x8xf32> -> vector<64x8xf32>
    %c0_25 = arith.constant 0 : index
    %79 = memref.load %arg1[%c0_25] : memref<1xf32, #tpu.memory_space<smem>>
    %80 = vector.broadcast %79 : f32 to vector<64x8xf32>
    %81 = arith.mulf %80, %78 : vector<64x8xf32>
    %82 = arith.addf %81, %64 : vector<64x8xf32>
    %83 = arith.addf %82, %12 : vector<64x8xf32>
    %84 = vector.extract_strided_slice %83 {offsets = [0, 0], sizes = [16, 8], strides = [1, 1]} : vector<64x8xf32> to vector<16x8xf32>
    %85 = vector.extract_strided_slice %83 {offsets = [16, 0], sizes = [16, 8], strides = [1, 1]} : vector<64x8xf32> to vector<16x8xf32>
    %86 = vector.extract_strided_slice %83 {offsets = [32, 0], sizes = [16, 8], strides = [1, 1]} : vector<64x8xf32> to vector<16x8xf32>
    %87 = vector.extract_strided_slice %83 {offsets = [48, 0], sizes = [16, 8], strides = [1, 1]} : vector<64x8xf32> to vector<16x8xf32>
    %cst_26 = arith.constant 0.000000e+00 : f32
    %88 = vector.broadcast %cst_26 : f32 to vector<16x96xf32>
    %89 = tpu.concatenate %84, %85, %86, %87, %88 in 1 : vector<16x8xf32>, vector<16x8xf32>, vector<16x8xf32>, vector<16x8xf32>, vector<16x96xf32> -> vector<16x128xf32>
    %90 = arith.extf %1 : vector<16x128xbf16> to vector<16x128xf32>
    %91 = arith.addf %90, %89 : vector<16x128xf32>
    %92 = arith.truncf %91 : vector<16x128xf32> to vector<16x128xbf16>
    %c0_27 = arith.constant 0 : index
    %c0_28 = arith.constant 0 : index
    %93 = vector.load %arg6[%c0_27, %c0_28] : memref<128x128xbf16, #tpu.memory_space<vmem>>, vector<128x128xbf16>
    %cst_29 = arith.constant dense<0.000000e+00> : vector<16x128xf32>
    %94 = tpu.matmul %92, %93, %cst_29 {dimension_numbers = #tpu.dot_dimension_numbers<[1], [0], [0], [1], [0, 0, 1, 1], [], []>} : vector<16x128xbf16>, vector<128x128xbf16>, vector<16x128xf32> -> vector<16x128xf32>
    %c0_30 = arith.constant 0 : index
    %c0_31 = arith.constant 0 : index
    %95 = vector.load %arg7[%c0_30, %c0_31] : memref<1x128xf32, #tpu.memory_space<vmem>>, vector<1x128xf32>
    %96 = vector.broadcast %95 : vector<1x128xf32> to vector<16x128xf32>
    %97 = arith.addf %94, %96 : vector<16x128xf32>
    %98 = arith.truncf %97 : vector<16x128xf32> to vector<16x128xbf16>
    %c0_32 = arith.constant 0 : index
    %c0_33 = arith.constant 0 : index
    %c0_34 = arith.constant 0 : index
    %99 = vector.load %arg8[%c0_32, %c0_33, %c0_34] : memref<1x16x128xbf16, #tpu.memory_space<vmem>>, vector<1x16x128xbf16>
    %100 = vector.shape_cast %99 : vector<1x16x128xbf16> to vector<16x128xbf16>
    %101 = vector.shape_cast %98 : vector<16x128xbf16> to vector<1x16x128xbf16>
    tpu.vector_store %arg8[%c0_32, %c0_33, %c0_34], %101 {strides = array<i32>} : memref<1x16x128xbf16, #tpu.memory_space<vmem>>, vector<1x16x128xbf16>,
    return
  }
  func.func @transform_0(%arg0: i32) -> i32 {
    %c0_i32 = arith.constant 0 : i32
    %c0_i32_0 = arith.constant 0 : i32
    return %c0_i32 : i32
  }
  func.func @transform_1(%arg0: i32) -> (i32, i32, i32) {
    %c0_i32 = arith.constant 0 : i32
    %c0_i32_0 = arith.constant 0 : i32
    %c0_i32_1 = arith.constant 0 : i32
    return %arg0, %c0_i32, %c0_i32_0 : i32, i32, i32
  }
  func.func @transform_2(%arg0: i32) -> (i32, i32, i32) {
    %c0_i32 = arith.constant 0 : i32
    %c0_i32_0 = arith.constant 0 : i32
    %c0_i32_1 = arith.constant 0 : i32
    return %arg0, %c0_i32, %c0_i32_0 : i32, i32, i32
  }
  func.func @transform_3(%arg0: i32) -> (i32, i32) {
    %c0_i32 = arith.constant 0 : i32
    %c0_i32_0 = arith.constant 0 : i32
    %c0_i32_1 = arith.constant 0 : i32
    return %c0_i32, %c0_i32_0 : i32, i32
  }
  func.func @transform_4(%arg0: i32) -> (i32, i32) {
    %c0_i32 = arith.constant 0 : i32
    %c0_i32_0 = arith.constant 0 : i32
    %c0_i32_1 = arith.constant 0 : i32
    return %c0_i32, %c0_i32_0 : i32, i32
  }
  func.func @transform_5(%arg0: i32) -> (i32, i32) {
    %c0_i32 = arith.constant 0 : i32
    %c0_i32_0 = arith.constant 0 : i32
    %c0_i32_1 = arith.constant 0 : i32
    return %c0_i32, %c0_i32_0 : i32, i32
  }
  func.func @transform_6(%arg0: i32) -> (i32, i32) {
    %c0_i32 = arith.constant 0 : i32
    %c0_i32_0 = arith.constant 0 : i32
    %c0_i32_1 = arith.constant 0 : i32
    return %c0_i32, %c0_i32_0 : i32, i32
  }
  func.func @transform_7(%arg0: i32) -> (i32, i32, i32) {
    %c0_i32 = arith.constant 0 : i32
    %c0_i32_0 = arith.constant 0 : i32
    %c0_i32_1 = arith.constant 0 : i32
    return %arg0, %c0_i32, %c0_i32_0 : i32, i32, i32
  }
}

</mosaic_0001>

<llo_original>
// kernel: tpu_custom_call.1
$region0: #{tpu_custom_call.1}
  #allocation0 [shape = 'u32[]', space=smem, size = 0x4, offset = 0x4, fixed_abs, tag = 'smem constant byte address 0x4 - core index']
  #allocation1 [shape = 'u32[144,128]{1,0:T(1,128)}', space=vmem, size = 0x12000, scoped, tag = 'internal scratch']
  #allocation2 [shape = 'f32[1]{0:T(128)S(6)}', space=smem, size = 0x200, scoped, tag = 'scoped memory for tpu_custom_call.1']
  %s0 = inlined_call_operand.<no memory space> [shape: f32[1], index: 0, kind: input, shape index: {}]
  %s1 = inlined_call_operand.hbm [shape: bf16[2,16,128], index: 1, kind: input, shape index: {}]
  %s2 = inlined_call_operand.hbm [shape: bf16[2,16,128], index: 2, kind: input, shape index: {}]
  %s3 = inlined_call_operand.hbm [shape: bf16[128,128], index: 3, kind: input, shape index: {}]
  %s4 = inlined_call_operand.hbm [shape: bf16[128,256], index: 4, kind: input, shape index: {}]
  %s5 = inlined_call_operand.hbm [shape: bf16[128,128], index: 5, kind: input, shape index: {}]
  %s6 = inlined_call_operand.vmem [shape: f32[1,128], index: 6, kind: input, shape index: {}]
  %s7 = inlined_call_operand.hbm [shape: bf16[2,16,128], index: 7, kind: output, shape index: {}]
  %s8 = sld [smem:[#allocation0]]
  $region81: #{tpu_custom_call.1} parent=0
    _
  %s10 = ssub.s32 1, %s8
  %s11 = scalar_select 0, %s10, %s8
  %12 = sst [smem:[#allocation2]] %s0
  $region1: #{tpu_custom_call.1} parent=0
    #allocation3 [shape = 'u8[8192]{0}', space=vmem, size = 0x2000, scoped, tag = 'input window, operand 1']
    #allocation4 [shape = 's32[2]{0}', space=sflag, size = 0x8, scoped, tag = 'scoped memory for tpu_custom_call.1']
    #allocation5 [shape = 's32[2]{0}', space=sflag, size = 0x8, scoped, tag = 'scoped memory for tpu_custom_call.1']
    #allocation6 [shape = 'u8[8192]{0}', space=vmem, size = 0x2000, scoped, tag = 'input window, operand 2']
    #allocation7 [shape = 's32[2]{0}', space=sflag, size = 0x8, scoped, tag = 'scoped memory for tpu_custom_call.1']
    #allocation8 [shape = 'u8[32768]{0}', space=vmem, size = 0x8000, scoped, tag = 'input window, operand 3, single buffered']
    #allocation9 [shape = 'u8[65536]{0}', space=vmem, size = 0x10000, scoped, tag = 'input window, operand 4, single buffered']
    #allocation10 [shape = 's32[1]{0}', space=sflag, size = 0x4, scoped, tag = 'scoped memory for tpu_custom_call.1']
    #allocation11 [shape = 'u8[32768]{0}', space=vmem, size = 0x8000, scoped, tag = 'input window, operand 5, single buffered']
    #allocation12 [shape = 'u8[8192]{0}', space=vmem, size = 0x2000, scoped, tag = 'output window, operand 0']
    %13 = vsyncpa [#allocation4], 0
    %s14 = scalar_lea.sflag [#allocation4], 1
    %15 = vsyncpa %s14, 0
    %16 = vsyncpa [#allocation7], 0
    %s17 = scalar_lea.sflag [#allocation7], 1
    %18 = vsyncpa %s17, 0
    %19 = vsyncpa [#allocation10], 0
    %20 = vsyncpa [#allocation5], 0
    %s21 = scalar_lea.sflag [#allocation5], 1
    %22 = vsyncpa %s21, 0
    loop: start=0, step=1, limit=4
    $region2: #{tpu_custom_call.1} parent=1 // loop_pre_header
      _
    $region3: #{tpu_custom_call.1} parent=1 // loop_header
      %s24 = sphi 0, %s28
      %p25 = scmp.ge.s32.totalorder %s24, 4
      %s32 = sphi 0, %s32
      %s34 = sphi 0, %s32
      %s35 = sphi 0, %s34
      %s49 = sphi 0, %s35
      %s55 = sphi 0, %s57
      %s58 = sphi 0, %s55
      %s59 = sphi 0, %s58
      %s75 = sphi 0, %s59
      %s81 = sphi 0, %s83
      %s84 = sphi 0, %s81
      %s85 = sphi 0, %s84
      %s101 = sphi 0, %s85
      %s105 = sphi 0, %s105
      %s107 = sphi 0, %s105
      %s108 = sphi 0, %s107
      %s122 = sphi 0, %s108
      %s126 = sphi 0, %s126
      %s128 = sphi 0, %s126
      %s129 = sphi 0, %s128
      %s143 = sphi 0, %s129
      %s147 = sphi 0, %s147
      %s149 = sphi 0, %s147
      %s150 = sphi 0, %s149
      %s164 = sphi 0, %s150
      %s168 = sphi 0, %s168
      %s170 = sphi 0, %s168
      %s171 = sphi 0, %s170
      %s185 = sphi 0, %s171
      %s191 = sphi 0, %s193
      %s194 = sphi 0, %s191
      %s195 = sphi 0, %s194
      %s211 = sphi 0, %s195
    $region4: #{tpu_custom_call.1} parent=1 // loop_header_branch
      %27 = sbr.rel (%p25) target = $region8
    $region5: #{tpu_custom_call.1} parent=1 // loop_body
      %s29 = ssub.s32 %s24, 1
      %s30 = ssub.s32 %s24, 2
      %s31 = sadd.s32 %s24, 1
      %s33 = sadd.s32 %s32, 1
      %p36 = scmp.eq.s32.totalorder %s24, 1
      %p37 = scmp.ne.s32.totalorder %s32, %s34
      %p38 = scmp.eq.s32.totalorder %s24, 0
      %p39 = por %p37, %p38
      %p40 = scmp.ne.s32.totalorder %s32, %s34
      %p41 = scmp.eq.s32.totalorder %s29, 1
      %p42 = por %p40, %p41
      %p43 = scmp.ne.s32.totalorder %s34, %s35
      %p44 = scmp.eq.s32.totalorder %s29, 0
      %p45 = por %p43, %p44
      %p46 = scmp.ne.s32.totalorder %s34, %s35
      %p47 = scmp.eq.s32.totalorder %s30, 1
      %p48 = por %p46, %p47
      %p50 = scmp.ne.s32.totalorder %s35, %s49
      %p51 = scmp.eq.s32.totalorder %s30, 0
      %p52 = por %p50, %p51
      %s53 = ssub.s32 %s24, %s31
      %p54 = scmp.eq.s32.totalorder %s53, 0
      %s56 = sadd.s32 %s55, 1
      %s57 = scalar_select %p54, %s55, %s56
      %p60 = pneg %p54
      %p61 = scmp.eq.s32.totalorder %s24, 1
      %p62 = por %p60, %p61
      %p63 = scmp.ne.s32.totalorder %s55, %s58
      %p64 = scmp.eq.s32.totalorder %s24, 0
      %p65 = por %p63, %p64
      %p66 = scmp.ne.s32.totalorder %s55, %s58
      %p67 = scmp.eq.s32.totalorder %s29, 1
      %p68 = por %p66, %p67
      %p69 = scmp.ne.s32.totalorder %s58, %s59
      %p70 = scmp.eq.s32.totalorder %s29, 0
      %p71 = por %p69, %p70
      %p72 = scmp.ne.s32.totalorder %s58, %s59
      %p73 = scmp.eq.s32.totalorder %s30, 1
      %p74 = por %p72, %p73
      %p76 = scmp.ne.s32.totalorder %s59, %s75
      %p77 = scmp.eq.s32.totalorder %s30, 0
      %p78 = por %p76, %p77
      %s79 = ssub.s32 %s24, %s31
      %p80 = scmp.eq.s32.totalorder %s79, 0
      %s82 = sadd.s32 %s81, 1
      %s83 = scalar_select %p80, %s81, %s82
      %p86 = pneg %p80
      %p87 = scmp.eq.s32.totalorder %s24, 1
      %p88 = por %p86, %p87
      %p89 = scmp.ne.s32.totalorder %s81, %s84
      %p90 = scmp.eq.s32.totalorder %s24, 0
      %p91 = por %p89, %p90
      %p92 = scmp.ne.s32.totalorder %s81, %s84
      %p93 = scmp.eq.s32.totalorder %s29, 1
      %p94 = por %p92, %p93
      %p95 = scmp.ne.s32.totalorder %s84, %s85
      %p96 = scmp.eq.s32.totalorder %s29, 0
      %p97 = por %p95, %p96
      %p98 = scmp.ne.s32.totalorder %s84, %s85
      %p99 = scmp.eq.s32.totalorder %s30, 1
      %p100 = por %p98, %p99
      %p102 = scmp.ne.s32.totalorder %s85, %s101
      %p103 = scmp.eq.s32.totalorder %s30, 0
      %p104 = por %p102, %p103
      %s106 = sadd.s32 %s105, 1
      %p109 = scmp.eq.s32.totalorder %s24, 1
      %p110 = scmp.ne.s32.totalorder %s105, %s107
      %p111 = scmp.eq.s32.totalorder %s24, 0
      %p112 = por %p110, %p111
      %p113 = scmp.ne.s32.totalorder %s105, %s107
      %p114 = scmp.eq.s32.totalorder %s29, 1
      %p115 = por %p113, %p114
      %p116 = scmp.ne.s32.totalorder %s107, %s108
      %p117 = scmp.eq.s32.totalorder %s29, 0
      %p118 = por %p116, %p117
      %p119 = scmp.ne.s32.totalorder %s107, %s108
      %p120 = scmp.eq.s32.totalorder %s30, 1
      %p121 = por %p119, %p120
      %p123 = scmp.ne.s32.totalorder %s108, %s122
      %p124 = scmp.eq.s32.totalorder %s30, 0
      %p125 = por %p123, %p124
      %s127 = sadd.s32 %s126, 1
      %p130 = scmp.eq.s32.totalorder %s24, 1
      %p131 = scmp.ne.s32.totalorder %s126, %s128
      %p132 = scmp.eq.s32.totalorder %s24, 0
      %p133 = por %p131, %p132
      %p134 = scmp.ne.s32.totalorder %s126, %s128
      %p135 = scmp.eq.s32.totalorder %s29, 1
      %p136 = por %p134, %p135
      %p137 = scmp.ne.s32.totalorder %s128, %s129
      %p138 = scmp.eq.s32.totalorder %s29, 0
      %p139 = por %p137, %p138
      %p140 = scmp.ne.s32.totalorder %s128, %s129
      %p141 = scmp.eq.s32.totalorder %s30, 1
      %p142 = por %p140, %p141
      %p144 = scmp.ne.s32.totalorder %s129, %s143
      %p145 = scmp.eq.s32.totalorder %s30, 0
      %p146 = por %p144, %p145
      %s148 = sadd.s32 %s147, 1
      %p151 = scmp.eq.s32.totalorder %s24, 1
      %p152 = scmp.ne.s32.totalorder %s147, %s149
      %p153 = scmp.eq.s32.totalorder %s24, 0
      %p154 = por %p152, %p153
      %p155 = scmp.ne.s32.totalorder %s147, %s149
      %p156 = scmp.eq.s32.totalorder %s29, 1
      %p157 = por %p155, %p156
      %p158 = scmp.ne.s32.totalorder %s149, %s150
      %p159 = scmp.eq.s32.totalorder %s29, 0
      %p160 = por %p158, %p159
      %p161 = scmp.ne.s32.totalorder %s149, %s150
      %p162 = scmp.eq.s32.totalorder %s30, 1
      %p163 = por %p161, %p162
      %p165 = scmp.ne.s32.totalorder %s150, %s164
      %p166 = scmp.eq.s32.totalorder %s30, 0
      %p167 = por %p165, %p166
      %s169 = sadd.s32 %s168, 1
      %p172 = scmp.eq.s32.totalorder %s24, 1
      %p173 = scmp.ne.s32.totalorder %s168, %s170
      %p174 = scmp.eq.s32.totalorder %s24, 0
      %p175 = por %p173, %p174
      %p176 = scmp.ne.s32.totalorder %s168, %s170
      %p177 = scmp.eq.s32.totalorder %s29, 1
      %p178 = por %p176, %p177
      %p179 = scmp.ne.s32.totalorder %s170, %s171
      %p180 = scmp.eq.s32.totalorder %s29, 0
      %p181 = por %p179, %p180
      %p182 = scmp.ne.s32.totalorder %s170, %s171
      %p183 = scmp.eq.s32.totalorder %s30, 1
      %p184 = por %p182, %p183
      %p186 = scmp.ne.s32.totalorder %s171, %s185
      %p187 = scmp.eq.s32.totalorder %s30, 0
      %p188 = por %p186, %p187
      %s189 = ssub.s32 %s24, %s31
      %p190 = scmp.eq.s32.totalorder %s189, 0
      %s192 = sadd.s32 %s191, 1
      %s193 = scalar_select %p190, %s191, %s192
      %p196 = pneg %p190
      %p197 = scmp.eq.s32.totalorder %s24, 1
      %p198 = por %p196, %p197
      %p199 = scmp.ne.s32.totalorder %s191, %s194
      %p200 = scmp.eq.s32.totalorder %s24, 0
      %p201 = por %p199, %p200
      %p202 = scmp.ne.s32.totalorder %s191, %s194
      %p203 = scmp.eq.s32.totalorder %s29, 1
      %p204 = por %p202, %p203
      %p205 = scmp.ne.s32.totalorder %s194, %s195
      %p206 = scmp.eq.s32.totalorder %s29, 0
      %p207 = por %p205, %p206
      %p208 = scmp.ne.s32.totalorder %s194, %s195
      %p209 = scmp.eq.s32.totalorder %s30, 1
      %p210 = por %p208, %p209
      %p212 = scmp.ne.s32.totalorder %s195, %s211
      %p213 = scmp.eq.s32.totalorder %s30, 0
      %p214 = por %p212, %p213
      %p215 = scmp.le.s32.totalorder 1, %s24
      %p216 = scmp.lt.s32.totalorder %s24, 3
      %p217 = pnand %p215, %p216
      %p218 = pneg %p217
      // Predicated region
      $region9: #{tpu_custom_call.1} parent=5 // pred_check
        _
      $region10: #{tpu_custom_call.1} parent=5 // pred_check_branch
        %220 = sbr.rel (%p217) target = $region12
      $region11: #{tpu_custom_call.1} parent=5 // pred_region
        %s221 = ssub.s32 %s24, 1
        // Predicated region
        $region13: #{tpu_custom_call.1} parent=11 // pred_check
          %p222 = pneg %p45
        $region14: #{tpu_custom_call.1} parent=11 // pred_check_branch
          %224 = sbr.rel (%p222) target = $region16
        $region15: #{tpu_custom_call.1} parent=11 // pred_region
          _
        $region16: #{tpu_custom_call.1} parent=11 // pred_fallthru
          _
        // Predicated region
        $region17: #{tpu_custom_call.1} parent=11 // pred_check
          %p225 = pneg %p118
        $region18: #{tpu_custom_call.1} parent=11 // pred_check_branch
          %227 = sbr.rel (%p225) target = $region20
        $region19: #{tpu_custom_call.1} parent=11 // pred_region
          %s229 = ssub.s32 1024, 1024
          %230 = vsyncadd [#allocation7], %s229
          %s231 = sshll.u32 [#allocation8], 4
          %s232 = int_to_ptr.vmem [resolvable:$true] %s231
          %237 = dma.hbm_to_vmem [thread:$0]  %s3, 1024, %s232, [#allocation7], 64, 64, 4
        $region20: #{tpu_custom_call.1} parent=11 // pred_fallthru
          _
        // Predicated region
        $region21: #{tpu_custom_call.1} parent=11 // pred_check
          %p238 = pneg %p139
        $region22: #{tpu_custom_call.1} parent=11 // pred_check_branch
          %240 = sbr.rel (%p238) target = $region24
        $region23: #{tpu_custom_call.1} parent=11 // pred_region
          %s242 = ssub.s32 2048, 2048
          %243 = vsyncadd [#allocation10], %s242
          %s244 = sshll.u32 [#allocation9], 4
          %s245 = int_to_ptr.vmem [resolvable:$true] %s244
          %250 = dma.hbm_to_vmem [thread:$0]  %s4, 2048, %s245, [#allocation10], 128, 128, 8
        $region24: #{tpu_custom_call.1} parent=11 // pred_fallthru
          _
        // Predicated region
        $region25: #{tpu_custom_call.1} parent=11 // pred_check
          %p251 = pneg %p160
        $region26: #{tpu_custom_call.1} parent=11 // pred_check_branch
          %253 = sbr.rel (%p251) target = $region28
        $region27: #{tpu_custom_call.1} parent=11 // pred_region
          %s255 = ssub.s32 1024, 1024
          %256 = vsyncadd [#allocation10], %s255
          %s257 = sshll.u32 [#allocation11], 4
          %s258 = int_to_ptr.vmem [resolvable:$true] %s257
          %263 = dma.hbm_to_vmem [thread:$0]  %s5, 1024, %s258, [#allocation10], 64, 64, 4
        $region28: #{tpu_custom_call.1} parent=11 // pred_fallthru
          _
        // Predicated region
        $region29: #{tpu_custom_call.1} parent=11 // pred_check
          %p264 = pneg %p181
        $region30: #{tpu_custom_call.1} parent=11 // pred_check_branch
          %266 = sbr.rel (%p264) target = $region32
        $region31: #{tpu_custom_call.1} parent=11 // pred_region
          _
        $region32: #{tpu_custom_call.1} parent=11 // pred_fallthru
          _
      $region12: #{tpu_custom_call.1} parent=5 // pred_fallthru
        _
      %p267 = scmp.lt.s32.totalorder %s24, 2
      // Predicated region
      $region33: #{tpu_custom_call.1} parent=5 // pred_check
        %p268 = pneg %p267
      $region34: #{tpu_custom_call.1} parent=5 // pred_check_branch
        %270 = sbr.rel (%p268) target = $region36
      $region35: #{tpu_custom_call.1} parent=5 // pred_region
        // Predicated region
        $region37: #{tpu_custom_call.1} parent=35 // pred_check
          %p271 = pneg %p65
        $region38: #{tpu_custom_call.1} parent=35 // pred_check_branch
          %273 = sbr.rel (%p271) target = $region40
        $region39: #{tpu_custom_call.1} parent=35 // pred_region
          %s274 = sand.u32 %s55, 1
          %s275 = scalar_lea.sflag [#allocation4], %s274
          %s276 = sand.u32 %s55, 1
          %s277 = smul.addr %s276, 8
          %s278 = scalar_lea.vmem [#allocation3], %s277
          %s280 = ssub.s32 128, 128
          %281 = vsyncadd %s275, %s280
          %s282 = smul.addr %s24, 2
          %s283 = smul.addr %s282, 64
          %s284 = scalar_lea.hbm %s1, %s283
          %s285 = sshll.u32 %s278, 4
          %s286 = int_to_ptr.vmem [resolvable:$true] %s285
          %291 = dma.hbm_to_vmem [thread:$0]  %s284, 128, %s286, %s275, 64, 64, 4
        $region40: #{tpu_custom_call.1} parent=35 // pred_fallthru
          _
        // Predicated region
        $region41: #{tpu_custom_call.1} parent=35 // pred_check
          %p292 = pneg %p91
        $region42: #{tpu_custom_call.1} parent=35 // pred_check_branch
          %294 = sbr.rel (%p292) target = $region44
        $region43: #{tpu_custom_call.1} parent=35 // pred_region
          %s295 = sand.u32 %s24, 1
          %s296 = scalar_lea.sflag [#allocation7], %s295
          %s297 = sand.u32 %s81, 1
          %s298 = smul.addr %s297, 8
          %s299 = scalar_lea.vmem [#allocation6], %s298
          %s301 = ssub.s32 128, 128
          %302 = vsyncadd %s296, %s301
          %s303 = smul.addr %s24, 2
          %s304 = smul.addr %s303, 64
          %s305 = scalar_lea.hbm %s2, %s304
          %s306 = sshll.u32 %s299, 4
          %s307 = int_to_ptr.vmem [resolvable:$true] %s306
          %312 = dma.hbm_to_vmem [thread:$0]  %s305, 128, %s307, %s296, 64, 64, 4
        $region44: #{tpu_custom_call.1} parent=35 // pred_fallthru
          _
      $region36: #{tpu_custom_call.1} parent=5 // pred_fallthru
        _
      %p313 = scmp.le.s32.totalorder 1, %s24
      %p314 = scmp.lt.s32.totalorder %s24, 3
      %p315 = pnand %p313, %p314
      %p316 = pneg %p315
      // Predicated region
      $region45: #{tpu_custom_call.1} parent=5 // pred_check
        _
      $region46: #{tpu_custom_call.1} parent=5 // pred_check_branch
        %318 = sbr.rel (%p315) target = $region48
      $region47: #{tpu_custom_call.1} parent=5 // pred_region
        %s319 = ssub.s32 %s24, 1
        %s320 = sand.u32 %s58, 1
        %s321 = scalar_lea.sflag [#allocation4], %s320
        %s322 = sand.u32 %s58, 1
        %s323 = smul.addr %s322, 8
        %s324 = scalar_lea.vmem [#allocation3], %s323
        // Predicated region
        $region49: #{tpu_custom_call.1} parent=47 // pred_check
          %p325 = pneg %p71
        $region50: #{tpu_custom_call.1} parent=47 // pred_check_branch
          %327 = sbr.rel (%p325) target = $region52
        $region51: #{tpu_custom_call.1} parent=47 // pred_region
          %328 = dma.done %s321, 128
        $region52: #{tpu_custom_call.1} parent=47 // pred_fallthru
          _
        %s329 = sand.u32 %s29, 1
        %s330 = scalar_lea.sflag [#allocation7], %s329
        %s331 = sand.u32 %s84, 1
        %s332 = smul.addr %s331, 8
        %s333 = scalar_lea.vmem [#allocation6], %s332
        // Predicated region
        $region53: #{tpu_custom_call.1} parent=47 // pred_check
          %p334 = pneg %p97
        $region54: #{tpu_custom_call.1} parent=47 // pred_check_branch
          %336 = sbr.rel (%p334) target = $region56
        $region55: #{tpu_custom_call.1} parent=47 // pred_region
          %337 = dma.done %s330, 128
        $region56: #{tpu_custom_call.1} parent=47 // pred_fallthru
          _
        // Predicated region
        $region57: #{tpu_custom_call.1} parent=47 // pred_check
          %p338 = pneg %p118
        $region58: #{tpu_custom_call.1} parent=47 // pred_check_branch
          %340 = sbr.rel (%p338) target = $region60
        $region59: #{tpu_custom_call.1} parent=47 // pred_region
          %341 = dma.done [#allocation7], 1024
        $region60: #{tpu_custom_call.1} parent=47 // pred_fallthru
          _
        // Predicated region
        $region61: #{tpu_custom_call.1} parent=47 // pred_check
          %p342 = pneg %p139
        $region62: #{tpu_custom_call.1} parent=47 // pred_check_branch
          %344 = sbr.rel (%p342) target = $region64
        $region63: #{tpu_custom_call.1} parent=47 // pred_region
          %345 = dma.done [#allocation10], 2048
        $region64: #{tpu_custom_call.1} parent=47 // pred_fallthru
          _
        // Predicated region
        $region65: #{tpu_custom_call.1} parent=47 // pred_check
          %p346 = pneg %p160
        $region66: #{tpu_custom_call.1} parent=47 // pred_check_branch
          %348 = sbr.rel (%p346) target = $region68
        $region67: #{tpu_custom_call.1} parent=47 // pred_region
          %349 = dma.done [#allocation10], 1024
        $region68: #{tpu_custom_call.1} parent=47 // pred_fallthru
          _
        %p350 = pneg %p45
        %p351 = pneg %p42
        %s352 = sand.u32 %s58, 1
        %s353 = scalar_lea.sflag [#allocation4], %s352
        %s354 = sand.u32 %s58, 1
        %s355 = smul.addr %s354, 8
        %s356 = scalar_lea.vmem [#allocation3], %s355
        %p357 = pneg %p71
        %p358 = pneg %p68
        %s359 = sand.u32 %s29, 1
        %s360 = scalar_lea.sflag [#allocation7], %s359
        %s361 = sand.u32 %s84, 1
        %s362 = smul.addr %s361, 8
        %s363 = scalar_lea.vmem [#allocation6], %s362
        %p364 = pneg %p97
        %p365 = pneg %p94
        %p366 = pneg %p118
        %p367 = pneg %p115
        %p368 = pneg %p139
        %p369 = pneg %p136
        %p370 = pneg %p160
        %p371 = pneg %p157
        %p372 = pneg %p181
        %p373 = pneg %p178
        %p374 = pneg %p207
        %p375 = pneg %p204
        %s376 = sand.u32 %s194, 1
        %s377 = scalar_lea.sflag [#allocation5], %s376
        %s378 = sand.u32 %s194, 1
        %s379 = smul.addr %s378, 8
        %s380 = scalar_lea.vmem [#allocation12], %s379
        %v382 = vld [vmem:[%s324] sm:$0xf]
        %v383 = vld [vmem:[%s324 + $0x4] sm:$0xf]
        %v384 = vld [vmem:[%s333] sm:$0xf]
        %v385 = vld [vmem:[%s333 + $0x4] sm:$0xf]
        %v386 = vld [vmem:[#allocation8] sm:$0xf]
        %v387 = vld [vmem:[#allocation8 + $0x4] sm:$0xf]
        %v388 = vld [vmem:[#allocation8 + $0x8] sm:$0xf]
        %v389 = vld [vmem:[#allocation8 + $0xc] sm:$0xf]
        %v390 = vld [vmem:[#allocation8 + $0x10] sm:$0xf]
        %v391 = vld [vmem:[#allocation8 + $0x14] sm:$0xf]
        %v392 = vld [vmem:[#allocation8 + $0x18] sm:$0xf]
        %v393 = vld [vmem:[#allocation8 + $0x1c] sm:$0xf]
        %v394 = vld [vmem:[#allocation8 + $0x20] sm:$0xf]
        %v395 = vld [vmem:[#allocation8 + $0x24] sm:$0xf]
        %v396 = vld [vmem:[#allocation8 + $0x28] sm:$0xf]
        %v397 = vld [vmem:[#allocation8 + $0x2c] sm:$0xf]
        %v398 = vld [vmem:[#allocation8 + $0x30] sm:$0xf]
        %v399 = vld [vmem:[#allocation8 + $0x34] sm:$0xf]
        %v400 = vld [vmem:[#allocation8 + $0x38] sm:$0xf]
        %v401 = vld [vmem:[#allocation8 + $0x3c] sm:$0xf]
        %v404 = vunpack.c.l.b16 %v382
        %v405 = vunpack.c.l.b16 %v383
        %v406 = vpack.c.b16 %v405, %v404
        %v424 = vunpack.c.l.b16 %v386
        %v425 = vunpack.c.l.b16 %v387
        %v426 = vunpack.c.l.b16 %v388
        %v427 = vunpack.c.l.b16 %v389
        %v428 = vunpack.c.l.b16 %v390
        %v429 = vunpack.c.l.b16 %v391
        %v430 = vunpack.c.l.b16 %v392
        %v431 = vunpack.c.l.b16 %v393
        %v432 = vunpack.c.l.b16 %v394
        %v433 = vunpack.c.l.b16 %v395
        %v434 = vunpack.c.l.b16 %v396
        %v435 = vunpack.c.l.b16 %v397
        %v436 = vunpack.c.l.b16 %v398
        %v437 = vunpack.c.l.b16 %v399
        %v438 = vunpack.c.l.b16 %v400
        %v439 = vunpack.c.l.b16 %v401
        %v440 = vpack.c.b16 %v425, %v424
        %v441 = vpack.c.b16 %v427, %v426
        %v442 = vpack.c.b16 %v429, %v428
        %v443 = vpack.c.b16 %v431, %v430
        %v444 = vpack.c.b16 %v433, %v432
        %v445 = vpack.c.b16 %v435, %v434
        %v446 = vpack.c.b16 %v437, %v436
        %v447 = vpack.c.b16 %v439, %v438
        %456 = vmatprep.subr.bf16.mxu0 0
        %457 = vmatpush1.bf16.msra.mxu0 %v440
        %458 = vmatprep.subr.bf16.mxu0 0
        %459 = vmatpush1.bf16.msra.mxu0 %v441
        %460 = vmatprep.subr.bf16.mxu0 0
        %461 = vmatpush1.bf16.msra.mxu0 %v442
        %462 = vmatprep.subr.bf16.mxu0 0
        %463 = vmatpush1.bf16.msra.mxu0 %v443
        %464 = vmatprep.subr.bf16.mxu0 0
        %465 = vmatpush1.bf16.msra.mxu0 %v444
        %466 = vmatprep.subr.bf16.mxu0 0
        %467 = vmatpush1.bf16.msra.mxu0 %v445
        %468 = vmatprep.subr.bf16.mxu0 0
        %469 = vmatpush1.bf16.msra.mxu0 %v446
        %470 = vmatprep.subr.bf16.mxu0 0
        %471 = vmatpush1.bf16.msra.mxu0 %v447
        %472 = vmatprep.subr.bf16.mxu0 0
        %473 = vmatpush1.bf16.msra.mxu0 0
        %474 = vmatprep.subr.bf16.mxu0 0
        %475 = vmatpush1.bf16.msra.mxu0 0
        %476 = vmatprep.subr.bf16.mxu0 0
        %477 = vmatpush1.bf16.msra.mxu0 0
        %478 = vmatprep.subr.bf16.mxu0 0
        %479 = vmatpush1.bf16.msra.mxu0 0
        %480 = vmatprep.subr.bf16.mxu0 0
        %481 = vmatpush1.bf16.msra.mxu0 0
        %482 = vmatprep.subr.bf16.mxu0 0
        %483 = vmatpush1.bf16.msra.mxu0 0
        %484 = vmatprep.subr.bf16.mxu0 0
        %485 = vmatpush1.bf16.msra.mxu0 0
        %486 = vmatprep.subr.bf16.mxu0 0
        %487 = vmatpush1.bf16.msra.mxu0 0
        %488 = vmatprep.mubr.bf16.mxu0 0
        %489 = vmatmul.mubr.bf16.gmra.mrb[0].mxu0 %v406
        %v490 = vpop.f32.mrb[0].mxu0
        %v491 = vadd.f32 0.0, %v490
        %v492 = vpop.f32.mrb[0].mxu0
        %v493 = vpop.f32.mrb[0].mxu0
        %v494 = vadd.f32 0.0, %v493
        %v495 = vpop.f32.mrb[0].mxu0
        %496 = vdwg.mxu0
        %v497 = vld [vmem:[#allocation9] sm:$0xff]
        %v498 = vld [vmem:[#allocation9 + $0x8] sm:$0xff]
        %v499 = vld [vmem:[#allocation9 + $0x10] sm:$0xff]
        %v500 = vld [vmem:[#allocation9 + $0x18] sm:$0xff]
        %v501 = vld [vmem:[#allocation9 + $0x20] sm:$0xff]
        %v502 = vld [vmem:[#allocation9 + $0x28] sm:$0xff]
        %v503 = vld [vmem:[#allocation9 + $0x30] sm:$0xff]
        %v504 = vld [vmem:[#allocation9 + $0x38] sm:$0xff]
        %v505 = vld [vmem:[#allocation9 + $0x40] sm:$0xff]
        %v506 = vld [vmem:[#allocation9 + $0x48] sm:$0xff]
        %v507 = vld [vmem:[#allocation9 + $0x50] sm:$0xff]
        %v508 = vld [vmem:[#allocation9 + $0x58] sm:$0xff]
        %v509 = vld [vmem:[#allocation9 + $0x60] sm:$0xff]
        %v510 = vld [vmem:[#allocation9 + $0x68] sm:$0xff]
        %v511 = vld [vmem:[#allocation9 + $0x70] sm:$0xff]
        %v512 = vld [vmem:[#allocation9 + $0x78] sm:$0xff]
        %v515 = vunpack.c.l.b16 %v384
        %v516 = vunpack.c.l.b16 %v385
        %v517 = vpack.c.b16 %v516, %v515
        %v535 = vunpack.c.l.b16 %v497
        %v536 = vunpack.c.h.b16 %v497
        %v537 = vunpack.c.l.b16 %v498
        %v538 = vunpack.c.h.b16 %v498
        %v539 = vunpack.c.l.b16 %v499
        %v540 = vunpack.c.h.b16 %v499
        %v541 = vunpack.c.l.b16 %v500
        %v542 = vunpack.c.h.b16 %v500
        %v543 = vunpack.c.l.b16 %v501
        %v544 = vunpack.c.h.b16 %v501
        %v545 = vunpack.c.l.b16 %v502
        %v546 = vunpack.c.h.b16 %v502
        %v547 = vunpack.c.l.b16 %v503
        %v548 = vunpack.c.h.b16 %v503
        %v549 = vunpack.c.l.b16 %v504
        %v550 = vunpack.c.h.b16 %v504
        %v551 = vunpack.c.l.b16 %v505
        %v552 = vunpack.c.h.b16 %v505
        %v553 = vunpack.c.l.b16 %v506
        %v554 = vunpack.c.h.b16 %v506
        %v555 = vunpack.c.l.b16 %v507
        %v556 = vunpack.c.h.b16 %v507
        %v557 = vunpack.c.l.b16 %v508
        %v558 = vunpack.c.h.b16 %v508
        %v559 = vunpack.c.l.b16 %v509
        %v560 = vunpack.c.h.b16 %v509
        %v561 = vunpack.c.l.b16 %v510
        %v562 = vunpack.c.h.b16 %v510
        %v563 = vunpack.c.l.b16 %v511
        %v564 = vunpack.c.h.b16 %v511
        %v565 = vunpack.c.l.b16 %v512
        %v566 = vunpack.c.h.b16 %v512
        %v567 = vpack.c.b16 %v537, %v535
        %v568 = vpack.c.b16 %v538, %v536
        %v569 = vpack.c.b16 %v541, %v539
        %v570 = vpack.c.b16 %v542, %v540
        %v571 = vpack.c.b16 %v545, %v543
        %v572 = vpack.c.b16 %v546, %v544
        %v573 = vpack.c.b16 %v549, %v547
        %v574 = vpack.c.b16 %v550, %v548
        %v575 = vpack.c.b16 %v553, %v551
        %v576 = vpack.c.b16 %v554, %v552
        %v577 = vpack.c.b16 %v557, %v555
        %v578 = vpack.c.b16 %v558, %v556
        %v579 = vpack.c.b16 %v561, %v559
        %v580 = vpack.c.b16 %v562, %v560
        %v581 = vpack.c.b16 %v565, %v563
        %v582 = vpack.c.b16 %v566, %v564
        %599 = vmatprep.subr.bf16.mxu0 %v568
        %600 = vmatpush1.bf16.msra.mxu0 %v567
        %601 = vmatprep.subr.bf16.mxu0 %v570
        %602 = vmatpush1.bf16.msra.mxu0 %v569
        %603 = vmatprep.subr.bf16.mxu0 %v572
        %604 = vmatpush1.bf16.msra.mxu0 %v571
        %605 = vmatprep.subr.bf16.mxu0 %v574
        %606 = vmatpush1.bf16.msra.mxu0 %v573
        %607 = vmatprep.subr.bf16.mxu0 %v576
        %608 = vmatpush1.bf16.msra.mxu0 %v575
        %609 = vmatprep.subr.bf16.mxu0 %v578
        %610 = vmatpush1.bf16.msra.mxu0 %v577
        %611 = vmatprep.subr.bf16.mxu0 %v580
        %612 = vmatpush1.bf16.msra.mxu0 %v579
        %613 = vmatprep.subr.bf16.mxu0 %v582
        %614 = vmatpush1.bf16.msra.mxu0 %v581
        %615 = vmatprep.subr.bf16.mxu0 0
        %616 = vmatpush1.bf16.msra.mxu0 0
        %617 = vmatprep.subr.bf16.mxu0 0
        %618 = vmatpush1.bf16.msra.mxu0 0
        %619 = vmatprep.subr.bf16.mxu0 0
        %620 = vmatpush1.bf16.msra.mxu0 0
        %621 = vmatprep.subr.bf16.mxu0 0
        %622 = vmatpush1.bf16.msra.mxu0 0
        %623 = vmatprep.subr.bf16.mxu0 0
        %624 = vmatpush1.bf16.msra.mxu0 0
        %625 = vmatprep.subr.bf16.mxu0 0
        %626 = vmatpush1.bf16.msra.mxu0 0
        %627 = vmatprep.subr.bf16.mxu0 0
        %628 = vmatpush1.bf16.msra.mxu0 0
        %629 = vmatprep.subr.bf16.mxu0 0
        %630 = vmatpush1.bf16.msra.mxu0 0
        %631 = vmatprep.mubr.bf16.mxu0 0
        %632 = vmatmul.mubr.bf16.gmra.mrb[0].mxu0 %v517
        %v633 = vpop.f32.mrb[0].mxu0
        %v634 = vadd.f32 0.0, %v633
        %v635 = vpop.f32.mrb[0].mxu0
        %v636 = vadd.f32 0.0, %v635
        %v637 = vpop.f32.mrb[0].mxu0
        %v638 = vadd.f32 0.0, %v637
        %v639 = vpop.f32.mrb[0].mxu0
        %v640 = vadd.f32 0.0, %v639
        %641 = vdwg.mxu0
        %644 = vrot.lane.b32.xlu0 %v491, 120
        %v645 = vpop.permute.xlu0 %644
        %646 = vrot.lane.b32.xlu0 %v494, 120
        %v647 = vpop.permute.xlu0 %646
        %650 = vrot.lane.b32.xlu0 %v491, 112
        %v651 = vpop.permute.xlu0 %650
        %652 = vrot.lane.b32.xlu0 %v494, 112
        %v653 = vpop.permute.xlu0 %652
        %656 = vrot.lane.b32.xlu0 %v491, 104
        %v657 = vpop.permute.xlu0 %656
        %658 = vrot.lane.b32.xlu0 %v494, 104
        %v659 = vpop.permute.xlu0 %658
        %664 = vrot.lane.b32.xlu0 %v634, 120
        %v665 = vpop.permute.xlu0 %664
        %666 = vrot.lane.b32.xlu0 %v638, 120
        %v667 = vpop.permute.xlu0 %666
        %670 = vrot.lane.b32.xlu0 %v634, 112
        %v671 = vpop.permute.xlu0 %670
        %672 = vrot.lane.b32.xlu0 %v638, 112
        %v673 = vpop.permute.xlu0 %672
        %676 = vrot.lane.b32.xlu0 %v634, 104
        %v677 = vpop.permute.xlu0 %676
        %678 = vrot.lane.b32.xlu0 %v638, 104
        %v679 = vpop.permute.xlu0 %678
        %684 = vrot.lane.b32.xlu0 %v636, 120
        %v685 = vpop.permute.xlu0 %684
        %686 = vrot.lane.b32.xlu0 %v640, 120
        %v687 = vpop.permute.xlu0 %686
        %690 = vrot.lane.b32.xlu0 %v636, 112
        %v691 = vpop.permute.xlu0 %690
        %692 = vrot.lane.b32.xlu0 %v640, 112
        %v693 = vpop.permute.xlu0 %692
        %696 = vrot.lane.b32.xlu0 %v636, 104
        %v697 = vpop.permute.xlu0 %696
        %698 = vrot.lane.b32.xlu0 %v640, 104
        %v699 = vpop.permute.xlu0 %698
        %v702 = vmul.f32 %v491, 0.35355338
        %v703 = vmul.f32 %v494, 0.35355338
        %v704 = vmul.f32 %v645, 0.35355338
        %v705 = vmul.f32 %v647, 0.35355338
        %v706 = vmul.f32 %v651, 0.35355338
        %v707 = vmul.f32 %v653, 0.35355338
        %v708 = vmul.f32 %v657, 0.35355338
        %v709 = vmul.f32 %v659, 0.35355338
        %v710 = vpack.c.bf16 %v703, %v702
        %v711 = vpack.c.bf16 %v705, %v704
        %v712 = vpack.c.bf16 %v707, %v706
        %v713 = vpack.c.bf16 %v709, %v708
        %v714 = vpack.c.bf16 %v638, %v634
        %v715 = vpack.c.bf16 %v667, %v665
        %v716 = vpack.c.bf16 %v673, %v671
        %v717 = vpack.c.bf16 %v679, %v677
        %v718 = vpack.c.bf16 %v640, %v636
        %v719 = vpack.c.bf16 %v687, %v685
        %v720 = vpack.c.bf16 %v693, %v691
        %v721 = vpack.c.bf16 %v699, %v697
        %vm722 = vcmask 64512
        %v724 = vsel %vm722, %v710, 0
        %v727 = vsel %vm722, %v714, 0
        %729 = vmatprep.subr.bf16.mxu0 0
        %730 = vmatpush1.bf16.xpose.msra.mxu0 %v727
        %731 = vmatprep.subr.bf16.mxu0 0
        %732 = vmatpush1.bf16.xpose.msra.mxu0 0
        %733 = vmatprep.subr.bf16.mxu0 0
        %734 = vmatpush1.bf16.xpose.msra.mxu0 0
        %735 = vmatprep.subr.bf16.mxu0 0
        %736 = vmatpush1.bf16.xpose.msra.mxu0 0
        %737 = vmatprep.subr.bf16.mxu0 0
        %738 = vmatpush1.bf16.xpose.msra.mxu0 0
        %739 = vmatprep.subr.bf16.mxu0 0
        %740 = vmatpush1.bf16.xpose.msra.mxu0 0
        %741 = vmatprep.subr.bf16.mxu0 0
        %742 = vmatpush1.bf16.xpose.msra.mxu0 0
        %743 = vmatprep.subr.bf16.mxu0 0
        %744 = vmatpush1.bf16.xpose.msra.mxu0 0
        %745 = vmatprep.subr.bf16.mxu0 0
        %746 = vmatpush1.bf16.xpose.msra.mxu0 0
        %747 = vmatprep.subr.bf16.mxu0 0
        %748 = vmatpush1.bf16.xpose.msra.mxu0 0
        %749 = vmatprep.subr.bf16.mxu0 0
        %750 = vmatpush1.bf16.xpose.msra.mxu0 0
        %751 = vmatprep.subr.bf16.mxu0 0
        %752 = vmatpush1.bf16.xpose.msra.mxu0 0
        %753 = vmatprep.subr.bf16.mxu0 0
        %754 = vmatpush1.bf16.xpose.msra.mxu0 0
        %755 = vmatprep.subr.bf16.mxu0 0
        %756 = vmatpush1.bf16.xpose.msra.mxu0 0
        %757 = vmatprep.subr.bf16.mxu0 0
        %758 = vmatpush1.bf16.xpose.msra.mxu0 0
        %759 = vmatprep.subr.bf16.mxu0 0
        %760 = vmatpush1.bf16.xpose.msra.mxu0 0
        %761 = vmatprep.mubr.bf16.mxu0 0
        %762 = vmatmul.mubr.bf16.gmra.mrb[0].mxu0 %v724
        %v763 = vpop.f32.mrb[0].mxu0
        %v764 = vadd.f32 0.0, %v763
        %v765 = vpop.f32.mrb[0].mxu0
        %v766 = vpop.f32.mrb[0].mxu0
        %v767 = vadd.f32 0.0, %v766
        %v768 = vpop.f32.mrb[0].mxu0
        %769 = vdwg.mxu0
        %v771 = vsel %vm722, %v711, 0
        %v774 = vsel %vm722, %v715, 0
        %776 = vmatprep.subr.bf16.mxu0 0
        %777 = vmatpush1.bf16.xpose.msra.mxu0 %v774
        %778 = vmatprep.subr.bf16.mxu0 0
        %779 = vmatpush1.bf16.xpose.msra.mxu0 0
        %780 = vmatprep.subr.bf16.mxu0 0
        %781 = vmatpush1.bf16.xpose.msra.mxu0 0
        %782 = vmatprep.subr.bf16.mxu0 0
        %783 = vmatpush1.bf16.xpose.msra.mxu0 0
        %784 = vmatprep.subr.bf16.mxu0 0
        %785 = vmatpush1.bf16.xpose.msra.mxu0 0
        %786 = vmatprep.subr.bf16.mxu0 0
        %787 = vmatpush1.bf16.xpose.msra.mxu0 0
        %788 = vmatprep.subr.bf16.mxu0 0
        %789 = vmatpush1.bf16.xpose.msra.mxu0 0
        %790 = vmatprep.subr.bf16.mxu0 0
        %791 = vmatpush1.bf16.xpose.msra.mxu0 0
        %792 = vmatprep.subr.bf16.mxu0 0
        %793 = vmatpush1.bf16.xpose.msra.mxu0 0
        %794 = vmatprep.subr.bf16.mxu0 0
        %795 = vmatpush1.bf16.xpose.msra.mxu0 0
        %796 = vmatprep.subr.bf16.mxu0 0
        %797 = vmatpush1.bf16.xpose.msra.mxu0 0
        %798 = vmatprep.subr.bf16.mxu0 0
        %799 = vmatpush1.bf16.xpose.msra.mxu0 0
        %800 = vmatprep.subr.bf16.mxu0 0
        %801 = vmatpush1.bf16.xpose.msra.mxu0 0
        %802 = vmatprep.subr.bf16.mxu0 0
        %803 = vmatpush1.bf16.xpose.msra.mxu0 0
        %804 = vmatprep.subr.bf16.mxu0 0
        %805 = vmatpush1.bf16.xpose.msra.mxu0 0
        %806 = vmatprep.subr.bf16.mxu0 0
        %807 = vmatpush1.bf16.xpose.msra.mxu0 0
        %808 = vmatprep.mubr.bf16.mxu0 0
        %809 = vmatmul.mubr.bf16.gmra.mrb[0].mxu0 %v771
        %v810 = vpop.f32.mrb[0].mxu0
        %v811 = vadd.f32 0.0, %v810
        %v812 = vpop.f32.mrb[0].mxu0
        %v813 = vpop.f32.mrb[0].mxu0
        %v814 = vadd.f32 0.0, %v813
        %v815 = vpop.f32.mrb[0].mxu0
        %816 = vdwg.mxu0
        %v818 = vsel %vm722, %v712, 0
        %v821 = vsel %vm722, %v716, 0
        %823 = vmatprep.subr.bf16.mxu0 0
        %824 = vmatpush1.bf16.xpose.msra.mxu0 %v821
        %825 = vmatprep.subr.bf16.mxu0 0
        %826 = vmatpush1.bf16.xpose.msra.mxu0 0
        %827 = vmatprep.subr.bf16.mxu0 0
        %828 = vmatpush1.bf16.xpose.msra.mxu0 0
        %829 = vmatprep.subr.bf16.mxu0 0
        %830 = vmatpush1.bf16.xpose.msra.mxu0 0
        %831 = vmatprep.subr.bf16.mxu0 0
        %832 = vmatpush1.bf16.xpose.msra.mxu0 0
        %833 = vmatprep.subr.bf16.mxu0 0
        %834 = vmatpush1.bf16.xpose.msra.mxu0 0
        %835 = vmatprep.subr.bf16.mxu0 0
        %836 = vmatpush1.bf16.xpose.msra.mxu0 0
        %837 = vmatprep.subr.bf16.mxu0 0
        %838 = vmatpush1.bf16.xpose.msra.mxu0 0
        %839 = vmatprep.subr.bf16.mxu0 0
        %840 = vmatpush1.bf16.xpose.msra.mxu0 0
        %841 = vmatprep.subr.bf16.mxu0 0
        %842 = vmatpush1.bf16.xpose.msra.mxu0 0
        %843 = vmatprep.subr.bf16.mxu0 0
        %844 = vmatpush1.bf16.xpose.msra.mxu0 0
        %845 = vmatprep.subr.bf16.mxu0 0
        %846 = vmatpush1.bf16.xpose.msra.mxu0 0
        %847 = vmatprep.subr.bf16.mxu0 0
        %848 = vmatpush1.bf16.xpose.msra.mxu0 0
        %849 = vmatprep.subr.bf16.mxu0 0
        %850 = vmatpush1.bf16.xpose.msra.mxu0 0
        %851 = vmatprep.subr.bf16.mxu0 0
        %852 = vmatpush1.bf16.xpose.msra.mxu0 0
        %853 = vmatprep.subr.bf16.mxu0 0
        %854 = vmatpush1.bf16.xpose.msra.mxu0 0
        %855 = vmatprep.mubr.bf16.mxu0 0
        %856 = vmatmul.mubr.bf16.gmra.mrb[0].mxu0 %v818
        %v857 = vpop.f32.mrb[0].mxu0
        %v858 = vadd.f32 0.0, %v857
        %v859 = vpop.f32.mrb[0].mxu0
        %v860 = vpop.f32.mrb[0].mxu0
        %v861 = vadd.f32 0.0, %v860
        %v862 = vpop.f32.mrb[0].mxu0
        %863 = vdwg.mxu0
        %v865 = vsel %vm722, %v713, 0
        %v868 = vsel %vm722, %v717, 0
        %870 = vmatprep.subr.bf16.mxu0 0
        %871 = vmatpush1.bf16.xpose.msra.mxu0 %v868
        %872 = vmatprep.subr.bf16.mxu0 0
        %873 = vmatpush1.bf16.xpose.msra.mxu0 0
        %874 = vmatprep.subr.bf16.mxu0 0
        %875 = vmatpush1.bf16.xpose.msra.mxu0 0
        %876 = vmatprep.subr.bf16.mxu0 0
        %877 = vmatpush1.bf16.xpose.msra.mxu0 0
        %878 = vmatprep.subr.bf16.mxu0 0
        %879 = vmatpush1.bf16.xpose.msra.mxu0 0
        %880 = vmatprep.subr.bf16.mxu0 0
        %881 = vmatpush1.bf16.xpose.msra.mxu0 0
        %882 = vmatprep.subr.bf16.mxu0 0
        %883 = vmatpush1.bf16.xpose.msra.mxu0 0
        %884 = vmatprep.subr.bf16.mxu0 0
        %885 = vmatpush1.bf16.xpose.msra.mxu0 0
        %886 = vmatprep.subr.bf16.mxu0 0
        %887 = vmatpush1.bf16.xpose.msra.mxu0 0
        %888 = vmatprep.subr.bf16.mxu0 0
        %889 = vmatpush1.bf16.xpose.msra.mxu0 0
        %890 = vmatprep.subr.bf16.mxu0 0
        %891 = vmatpush1.bf16.xpose.msra.mxu0 0
        %892 = vmatprep.subr.bf16.mxu0 0
        %893 = vmatpush1.bf16.xpose.msra.mxu0 0
        %894 = vmatprep.subr.bf16.mxu0 0
        %895 = vmatpush1.bf16.xpose.msra.mxu0 0
        %896 = vmatprep.subr.bf16.mxu0 0
        %897 = vmatpush1.bf16.xpose.msra.mxu0 0
        %898 = vmatprep.subr.bf16.mxu0 0
        %899 = vmatpush1.bf16.xpose.msra.mxu0 0
        %900 = vmatprep.subr.bf16.mxu0 0
        %901 = vmatpush1.bf16.xpose.msra.mxu0 0
        %902 = vmatprep.mubr.bf16.mxu0 0
        %903 = vmatmul.mubr.bf16.gmra.mrb[0].mxu0 %v865
        %v904 = vpop.f32.mrb[0].mxu0
        %v905 = vadd.f32 0.0, %v904
        %v906 = vpop.f32.mrb[0].mxu0
        %v907 = vpop.f32.mrb[0].mxu0
        %v908 = vadd.f32 0.0, %v907
        %v909 = vpop.f32.mrb[0].mxu0
        %910 = vdwg.mxu0
        %vm911 = vcmask 130048
        %v912 = vsel %vm911, %v764, -inf
        %913 = vmax.xlane.f32.xlu0 %v912
        %v914 = vpop.xlane.xlu0 %913
        %v915 = vsel %vm911, %v767, -inf
        %916 = vmax.xlane.f32.xlu0 %v915
        %v917 = vpop.xlane.xlu0 %916
        %v918 = vsel %vm911, %v811, -inf
        %919 = vmax.xlane.f32.xlu0 %v918
        %v920 = vpop.xlane.xlu0 %919
        %v921 = vsel %vm911, %v814, -inf
        %922 = vmax.xlane.f32.xlu0 %v921
        %v923 = vpop.xlane.xlu0 %922
        %v924 = vsel %vm911, %v858, -inf
        %925 = vmax.xlane.f32.xlu0 %v924
        %v926 = vpop.xlane.xlu0 %925
        %v927 = vsel %vm911, %v861, -inf
        %928 = vmax.xlane.f32.xlu0 %v927
        %v929 = vpop.xlane.xlu0 %928
        %v930 = vsel %vm911, %v905, -inf
        %931 = vmax.xlane.f32.xlu0 %v930
        %v932 = vpop.xlane.xlu0 %931
        %v933 = vsel %vm911, %v908, -inf
        %934 = vmax.xlane.f32.xlu0 %v933
        %v935 = vpop.xlane.xlu0 %934
        %v936 = vsub.f32 %v764, %v914
        %v937 = vsub.f32 %v767, %v917
        %v938 = vsub.f32 %v811, %v920
        %v939 = vsub.f32 %v814, %v923
        %v940 = vsub.f32 %v858, %v926
        %v941 = vsub.f32 %v861, %v929
        %v942 = vsub.f32 %v905, %v932
        %v943 = vsub.f32 %v908, %v935
        %v944 = vmul.f32 %v936, 1.442695
        %v945 = vpow.pop %v944
        %v946 = vmul.f32 %v937, 1.442695
        %v947 = vpow.pop %v946
        %v948 = vmul.f32 %v938, 1.442695
        %v949 = vpow.pop %v948
        %v950 = vmul.f32 %v939, 1.442695
        %v951 = vpow.pop %v950
        %v952 = vmul.f32 %v940, 1.442695
        %v953 = vpow.pop %v952
        %v954 = vmul.f32 %v941, 1.442695
        %v955 = vpow.pop %v954
        %v956 = vmul.f32 %v942, 1.442695
        %v957 = vpow.pop %v956
        %v958 = vmul.f32 %v943, 1.442695
        %v959 = vpow.pop %v958
        %v960 = vsel %vm911, %v945, 0.0
        %961 = vadd.xlane.f32.xlu0 %v960
        %v962 = vpop.xlane.xlu0 %961
        %v963 = vsel %vm911, %v947, 0.0
        %964 = vadd.xlane.f32.xlu0 %v963
        %v965 = vpop.xlane.xlu0 %964
        %v966 = vsel %vm911, %v949, 0.0
        %967 = vadd.xlane.f32.xlu0 %v966
        %v968 = vpop.xlane.xlu0 %967
        %v969 = vsel %vm911, %v951, 0.0
        %970 = vadd.xlane.f32.xlu0 %v969
        %v971 = vpop.xlane.xlu0 %970
        %v972 = vsel %vm911, %v953, 0.0
        %973 = vadd.xlane.f32.xlu0 %v972
        %v974 = vpop.xlane.xlu0 %973
        %v975 = vsel %vm911, %v955, 0.0
        %976 = vadd.xlane.f32.xlu0 %v975
        %v977 = vpop.xlane.xlu0 %976
        %v978 = vsel %vm911, %v957, 0.0
        %979 = vadd.xlane.f32.xlu0 %v978
        %v980 = vpop.xlane.xlu0 %979
        %v981 = vsel %vm911, %v959, 0.0
        %982 = vadd.xlane.f32.xlu0 %v981
        %v983 = vpop.xlane.xlu0 %982
        %v984 = vrcp.pop %v962
        %v985 = vrcp.pop %v965
        %v986 = vrcp.pop %v968
        %v987 = vrcp.pop %v971
        %v988 = vrcp.pop %v974
        %v989 = vrcp.pop %v977
        %v990 = vrcp.pop %v980
        %v991 = vrcp.pop %v983
        %v992 = vmul.f32 %v945, %v984
        %v993 = vmul.f32 %v947, %v985
        %v994 = vmul.f32 %v949, %v986
        %v995 = vmul.f32 %v951, %v987
        %v996 = vmul.f32 %v953, %v988
        %v997 = vmul.f32 %v955, %v989
        %v998 = vmul.f32 %v957, %v990
        %v999 = vmul.f32 %v959, %v991
        %v1000 = vpack.c.bf16 %v993, %v992
        %v1001 = vpack.c.bf16 %v995, %v994
        %v1002 = vpack.c.bf16 %v997, %v996
        %v1003 = vpack.c.bf16 %v999, %v998
        %v1005 = vsel %vm911, %v1000, 0
        %1007 = vmatprep.subr.bf16.mxu0 0
        %1008 = vmatpush1.bf16.msra.mxu0 %v718
        %1009 = vmatprep.subr.bf16.mxu0 0
        %1010 = vmatpush1.bf16.msra.mxu0 0
        %1011 = vmatprep.subr.bf16.mxu0 0
        %1012 = vmatpush1.bf16.msra.mxu0 0
        %1013 = vmatprep.subr.bf16.mxu0 0
        %1014 = vmatpush1.bf16.msra.mxu0 0
        %1015 = vmatprep.subr.bf16.mxu0 0
        %1016 = vmatpush1.bf16.msra.mxu0 0
        %1017 = vmatprep.subr.bf16.mxu0 0
        %1018 = vmatpush1.bf16.msra.mxu0 0
        %1019 = vmatprep.subr.bf16.mxu0 0
        %1020 = vmatpush1.bf16.msra.mxu0 0
        %1021 = vmatprep.subr.bf16.mxu0 0
        %1022 = vmatpush1.bf16.msra.mxu0 0
        %1023 = vmatprep.subr.bf16.mxu0 0
        %1024 = vmatpush1.bf16.msra.mxu0 0
        %1025 = vmatprep.subr.bf16.mxu0 0
        %1026 = vmatpush1.bf16.msra.mxu0 0
        %1027 = vmatprep.subr.bf16.mxu0 0
        %1028 = vmatpush1.bf16.msra.mxu0 0
        %1029 = vmatprep.subr.bf16.mxu0 0
        %1030 = vmatpush1.bf16.msra.mxu0 0
        %1031 = vmatprep.subr.bf16.mxu0 0
        %1032 = vmatpush1.bf16.msra.mxu0 0
        %1033 = vmatprep.subr.bf16.mxu0 0
        %1034 = vmatpush1.bf16.msra.mxu0 0
        %1035 = vmatprep.subr.bf16.mxu0 0
        %1036 = vmatpush1.bf16.msra.mxu0 0
        %1037 = vmatprep.subr.bf16.mxu0 0
        %1038 = vmatpush1.bf16.msra.mxu0 0
        %1039 = vmatprep.mubr.bf16.mxu0 0
        %1040 = vmatmul.mubr.bf16.gmra.mrb[0].mxu0 %v1005
        %v1041 = vpop.f32.mrb[0].mxu0
        %v1042 = vadd.f32 0.0, %v1041
        %v1043 = vpop.f32.mrb[0].mxu0
        %v1044 = vpop.f32.mrb[0].mxu0
        %v1045 = vadd.f32 0.0, %v1044
        %v1046 = vpop.f32.mrb[0].mxu0
        %1047 = vdwg.mxu0
        %v1049 = vsel %vm911, %v1001, 0
        %1051 = vmatprep.subr.bf16.mxu0 0
        %1052 = vmatpush1.bf16.msra.mxu0 %v719
        %1053 = vmatprep.subr.bf16.mxu0 0
        %1054 = vmatpush1.bf16.msra.mxu0 0
        %1055 = vmatprep.subr.bf16.mxu0 0
        %1056 = vmatpush1.bf16.msra.mxu0 0
        %1057 = vmatprep.subr.bf16.mxu0 0
        %1058 = vmatpush1.bf16.msra.mxu0 0
        %1059 = vmatprep.subr.bf16.mxu0 0
        %1060 = vmatpush1.bf16.msra.mxu0 0
        %1061 = vmatprep.subr.bf16.mxu0 0
        %1062 = vmatpush1.bf16.msra.mxu0 0
        %1063 = vmatprep.subr.bf16.mxu0 0
        %1064 = vmatpush1.bf16.msra.mxu0 0
        %1065 = vmatprep.subr.bf16.mxu0 0
        %1066 = vmatpush1.bf16.msra.mxu0 0
        %1067 = vmatprep.subr.bf16.mxu0 0
        %1068 = vmatpush1.bf16.msra.mxu0 0
        %1069 = vmatprep.subr.bf16.mxu0 0
        %1070 = vmatpush1.bf16.msra.mxu0 0
        %1071 = vmatprep.subr.bf16.mxu0 0
        %1072 = vmatpush1.bf16.msra.mxu0 0
        %1073 = vmatprep.subr.bf16.mxu0 0
        %1074 = vmatpush1.bf16.msra.mxu0 0
        %1075 = vmatprep.subr.bf16.mxu0 0
        %1076 = vmatpush1.bf16.msra.mxu0 0
        %1077 = vmatprep.subr.bf16.mxu0 0
        %1078 = vmatpush1.bf16.msra.mxu0 0
        %1079 = vmatprep.subr.bf16.mxu0 0
        %1080 = vmatpush1.bf16.msra.mxu0 0
        %1081 = vmatprep.subr.bf16.mxu0 0
        %1082 = vmatpush1.bf16.msra.mxu0 0
        %1083 = vmatprep.mubr.bf16.mxu0 0
        %1084 = vmatmul.mubr.bf16.gmra.mrb[0].mxu0 %v1049
        %v1085 = vpop.f32.mrb[0].mxu0
        %v1086 = vadd.f32 0.0, %v1085
        %v1087 = vpop.f32.mrb[0].mxu0
        %v1088 = vpop.f32.mrb[0].mxu0
        %v1089 = vadd.f32 0.0, %v1088
        %v1090 = vpop.f32.mrb[0].mxu0
        %1091 = vdwg.mxu0
        %v1093 = vsel %vm911, %v1002, 0
        %1095 = vmatprep.subr.bf16.mxu0 0
        %1096 = vmatpush1.bf16.msra.mxu0 %v720
        %1097 = vmatprep.subr.bf16.mxu0 0
        %1098 = vmatpush1.bf16.msra.mxu0 0
        %1099 = vmatprep.subr.bf16.mxu0 0
        %1100 = vmatpush1.bf16.msra.mxu0 0
        %1101 = vmatprep.subr.bf16.mxu0 0
        %1102 = vmatpush1.bf16.msra.mxu0 0
        %1103 = vmatprep.subr.bf16.mxu0 0
        %1104 = vmatpush1.bf16.msra.mxu0 0
        %1105 = vmatprep.subr.bf16.mxu0 0
        %1106 = vmatpush1.bf16.msra.mxu0 0
        %1107 = vmatprep.subr.bf16.mxu0 0
        %1108 = vmatpush1.bf16.msra.mxu0 0
        %1109 = vmatprep.subr.bf16.mxu0 0
        %1110 = vmatpush1.bf16.msra.mxu0 0
        %1111 = vmatprep.subr.bf16.mxu0 0
        %1112 = vmatpush1.bf16.msra.mxu0 0
        %1113 = vmatprep.subr.bf16.mxu0 0
        %1114 = vmatpush1.bf16.msra.mxu0 0
        %1115 = vmatprep.subr.bf16.mxu0 0
        %1116 = vmatpush1.bf16.msra.mxu0 0
        %1117 = vmatprep.subr.bf16.mxu0 0
        %1118 = vmatpush1.bf16.msra.mxu0 0
        %1119 = vmatprep.subr.bf16.mxu0 0
        %1120 = vmatpush1.bf16.msra.mxu0 0
        %1121 = vmatprep.subr.bf16.mxu0 0
        %1122 = vmatpush1.bf16.msra.mxu0 0
        %1123 = vmatprep.subr.bf16.mxu0 0
        %1124 = vmatpush1.bf16.msra.mxu0 0
        %1125 = vmatprep.subr.bf16.mxu0 0
        %1126 = vmatpush1.bf16.msra.mxu0 0
        %1127 = vmatprep.mubr.bf16.mxu0 0
        %1128 = vmatmul.mubr.bf16.gmra.mrb[0].mxu0 %v1093
        %v1129 = vpop.f32.mrb[0].mxu0
        %v1130 = vadd.f32 0.0, %v1129
        %v1131 = vpop.f32.mrb[0].mxu0
        %v1132 = vpop.f32.mrb[0].mxu0
        %v1133 = vadd.f32 0.0, %v1132
        %v1134 = vpop.f32.mrb[0].mxu0
        %1135 = vdwg.mxu0
        %v1137 = vsel %vm911, %v1003, 0
        %1139 = vmatprep.subr.bf16.mxu0 0
        %1140 = vmatpush1.bf16.msra.mxu0 %v721
        %1141 = vmatprep.subr.bf16.mxu0 0
        %1142 = vmatpush1.bf16.msra.mxu0 0
        %1143 = vmatprep.subr.bf16.mxu0 0
        %1144 = vmatpush1.bf16.msra.mxu0 0
        %1145 = vmatprep.subr.bf16.mxu0 0
        %1146 = vmatpush1.bf16.msra.mxu0 0
        %1147 = vmatprep.subr.bf16.mxu0 0
        %1148 = vmatpush1.bf16.msra.mxu0 0
        %1149 = vmatprep.subr.bf16.mxu0 0
        %1150 = vmatpush1.bf16.msra.mxu0 0
        %1151 = vmatprep.subr.bf16.mxu0 0
        %1152 = vmatpush1.bf16.msra.mxu0 0
        %1153 = vmatprep.subr.bf16.mxu0 0
        %1154 = vmatpush1.bf16.msra.mxu0 0
        %1155 = vmatprep.subr.bf16.mxu0 0
        %1156 = vmatpush1.bf16.msra.mxu0 0
        %1157 = vmatprep.subr.bf16.mxu0 0
        %1158 = vmatpush1.bf16.msra.mxu0 0
        %1159 = vmatprep.subr.bf16.mxu0 0
        %1160 = vmatpush1.bf16.msra.mxu0 0
        %1161 = vmatprep.subr.bf16.mxu0 0
        %1162 = vmatpush1.bf16.msra.mxu0 0
        %1163 = vmatprep.subr.bf16.mxu0 0
        %1164 = vmatpush1.bf16.msra.mxu0 0
        %1165 = vmatprep.subr.bf16.mxu0 0
        %1166 = vmatpush1.bf16.msra.mxu0 0
        %1167 = vmatprep.subr.bf16.mxu0 0
        %1168 = vmatpush1.bf16.msra.mxu0 0
        %1169 = vmatprep.subr.bf16.mxu0 0
        %1170 = vmatpush1.bf16.msra.mxu0 0
        %1171 = vmatprep.mubr.bf16.mxu0 0
        %1172 = vmatmul.mubr.bf16.gmra.mrb[0].mxu0 %v1137
        %v1173 = vpop.f32.mrb[0].mxu0
        %v1174 = vadd.f32 0.0, %v1173
        %v1175 = vpop.f32.mrb[0].mxu0
        %v1176 = vpop.f32.mrb[0].mxu0
        %v1177 = vadd.f32 0.0, %v1176
        %v1178 = vpop.f32.mrb[0].mxu0
        %1179 = vdwg.mxu0
        %v1180 = vpack.c.bf16 %v1045, %v1042
        %v1181 = vpack.c.bf16 %v1089, %v1086
        %v1182 = vpack.c.bf16 %v1133, %v1130
        %v1183 = vpack.c.bf16 %v1177, %v1174
        %1184 = vxpose.xlu0.c.b16.start [1/8] %v1180, 128
        %1185 = vxpose.xlu0.c.b16.cont [2/8] %v1181, 128
        %1186 = vxpose.xlu0.c.b16.cont [3/8] %v1182, 128
        %1187 = vxpose.xlu0.c.b16.cont [4/8] %v1183, 128
        %1188 = vxpose.xlu0.c.b16.cont [5/8] 0, 128
        %1189 = vxpose.xlu0.c.b16.cont [6/8] 0, 128
        %1190 = vxpose.xlu0.c.b16.cont [7/8] 0, 128
        %1191 = vxpose.xlu0.c.b16.end [8/8] 0, 128
        %v1192 = vpop.trf.xlu0
        %v1193 = vpop.trf.xlu0
        %v1194 = vpop.trf.xlu0
        %v1195 = vpop.trf.xlu0
        %v1196 = vpop.trf.xlu0
        %v1197 = vpop.trf.xlu0
        %v1198 = vpop.trf.xlu0
        %v1199 = vpop.trf.xlu0
        %vm1200 = vcmask 523264
        %v1202 = vsel %vm1200, %v1192, 0
        %1204 = vmatprep.subr.bf16.mxu0 0
        %1205 = vmatpush1.bf16.msra.mxu0 %v1180
        %1206 = vmatprep.subr.bf16.mxu0 0
        %1207 = vmatpush1.bf16.msra.mxu0 %v1181
        %1208 = vmatprep.subr.bf16.mxu0 0
        %1209 = vmatpush1.bf16.msra.mxu0 %v1182
        %1210 = vmatprep.subr.bf16.mxu0 0
        %1211 = vmatpush1.bf16.msra.mxu0 %v1183
        %1212 = vmatprep.subr.bf16.mxu0 0
        %1213 = vmatpush1.bf16.msra.mxu0 0
        %1214 = vmatprep.subr.bf16.mxu0 0
        %1215 = vmatpush1.bf16.msra.mxu0 0
        %1216 = vmatprep.subr.bf16.mxu0 0
        %1217 = vmatpush1.bf16.msra.mxu0 0
        %1218 = vmatprep.subr.bf16.mxu0 0
        %1219 = vmatpush1.bf16.msra.mxu0 0
        %1220 = vmatprep.subr.bf16.mxu0 0
        %1221 = vmatpush1.bf16.msra.mxu0 0
        %1222 = vmatprep.subr.bf16.mxu0 0
        %1223 = vmatpush1.bf16.msra.mxu0 0
        %1224 = vmatprep.subr.bf16.mxu0 0
        %1225 = vmatpush1.bf16.msra.mxu0 0
        %1226 = vmatprep.subr.bf16.mxu0 0
        %1227 = vmatpush1.bf16.msra.mxu0 0
        %1228 = vmatprep.subr.bf16.mxu0 0
        %1229 = vmatpush1.bf16.msra.mxu0 0
        %1230 = vmatprep.subr.bf16.mxu0 0
        %1231 = vmatpush1.bf16.msra.mxu0 0
        %1232 = vmatprep.subr.bf16.mxu0 0
        %1233 = vmatpush1.bf16.msra.mxu0 0
        %1234 = vmatprep.subr.bf16.mxu0 0
        %1235 = vmatpush1.bf16.msra.mxu0 0
        %1236 = vmatprep.mubr.bf16.mxu0 0
        %1237 = vmatmul.mubr.bf16.gmra.mrb[0].mxu0 %v1202
        %v1238 = vpop.f32.mrb[0].mxu0
        %v1239 = vadd.f32 0.0, %v1238
        %v1240 = vpop.f32.mrb[0].mxu0
        %v1241 = vpop.f32.mrb[0].mxu0
        %v1242 = vpop.f32.mrb[0].mxu0
        %1243 = vdwg.mxu0
        %v1244 = vsel %vm722, %v1239, -inf
        %1245 = vmax.xlane.f32.xlu0 %v1244
        %v1246 = vpop.xlane.xlu0 %1245
        %v1247 = vsub.f32 %v1239, %v1246
        %v1248 = vmul.f32 %v1247, 1.442695
        %v1249 = vpow.pop %v1248
        %v1250 = vsel %vm722, %v1249, 0.0
        %1251 = vadd.xlane.f32.xlu0 %v1250
        %v1252 = vpop.xlane.xlu0 %1251
        %v1253 = vrcp.pop %v1252
        %v1254 = vmul.f32 %v1249, %v1253
        %v1255 = vpack.c.bf16 %v1254, %v1254
        %v1257 = vsel %vm722, %v1180, 0
        %v1260 = vsel %vm722, %v1181, 0
        %v1263 = vsel %vm722, %v1182, 0
        %v1266 = vsel %vm722, %v1183, 0
        %v1269 = vsel %vm722, %v1255, 0
        %1271 = vmatprep.subr.bf16.mxu0 0
        %1272 = vmatpush1.bf16.xpose.msra.mxu0 %v1269
        %1273 = vmatprep.subr.bf16.mxu0 0
        %1274 = vmatpush1.bf16.xpose.msra.mxu0 0
        %1275 = vmatprep.subr.bf16.mxu0 0
        %1276 = vmatpush1.bf16.xpose.msra.mxu0 0
        %1277 = vmatprep.subr.bf16.mxu0 0
        %1278 = vmatpush1.bf16.xpose.msra.mxu0 0
        %1279 = vmatprep.subr.bf16.mxu0 0
        %1280 = vmatpush1.bf16.xpose.msra.mxu0 0
        %1281 = vmatprep.subr.bf16.mxu0 0
        %1282 = vmatpush1.bf16.xpose.msra.mxu0 0
        %1283 = vmatprep.subr.bf16.mxu0 0
        %1284 = vmatpush1.bf16.xpose.msra.mxu0 0
        %1285 = vmatprep.subr.bf16.mxu0 0
        %1286 = vmatpush1.bf16.xpose.msra.mxu0 0
        %1287 = vmatprep.subr.bf16.mxu0 0
        %1288 = vmatpush1.bf16.xpose.msra.mxu0 0
        %1289 = vmatprep.subr.bf16.mxu0 0
        %1290 = vmatpush1.bf16.xpose.msra.mxu0 0
        %1291 = vmatprep.subr.bf16.mxu0 0
        %1292 = vmatpush1.bf16.xpose.msra.mxu0 0
        %1293 = vmatprep.subr.bf16.mxu0 0
        %1294 = vmatpush1.bf16.xpose.msra.mxu0 0
        %1295 = vmatprep.subr.bf16.mxu0 0
        %1296 = vmatpush1.bf16.xpose.msra.mxu0 0
        %1297 = vmatprep.subr.bf16.mxu0 0
        %1298 = vmatpush1.bf16.xpose.msra.mxu0 0
        %1299 = vmatprep.subr.bf16.mxu0 0
        %1300 = vmatpush1.bf16.xpose.msra.mxu0 0
        %1301 = vmatprep.subr.bf16.mxu0 0
        %1302 = vmatpush1.bf16.xpose.msra.mxu0 0
        %1303 = vmatprep.mubr.bf16.mxu0 0
        %1304 = vmatmul.mubr.bf16.gmra.mrb[0].mxu0 %v1257
        %v1305 = vpop.f32.mrb[0].mxu0
        %v1306 = vadd.f32 0.0, %v1305
        %v1307 = vpop.f32.mrb[0].mxu0
        %v1308 = vpop.f32.mrb[0].mxu0
        %v1309 = vadd.f32 0.0, %v1308
        %v1310 = vpop.f32.mrb[0].mxu0
        %1311 = vmatprep.mubr.bf16.mxu0 0
        %1312 = vmatmul.mubr.bf16.gmra.mrb[0].mxu0 %v1260
        %v1313 = vpop.f32.mrb[0].mxu0
        %v1314 = vadd.f32 0.0, %v1313
        %v1315 = vpop.f32.mrb[0].mxu0
        %v1316 = vpop.f32.mrb[0].mxu0
        %v1317 = vadd.f32 0.0, %v1316
        %v1318 = vpop.f32.mrb[0].mxu0
        %1319 = vmatprep.mubr.bf16.mxu0 0
        %1320 = vmatmul.mubr.bf16.gmra.mrb[0].mxu0 %v1263
        %v1321 = vpop.f32.mrb[0].mxu0
        %v1322 = vadd.f32 0.0, %v1321
        %v1323 = vpop.f32.mrb[0].mxu0
        %v1324 = vpop.f32.mrb[0].mxu0
        %v1325 = vadd.f32 0.0, %v1324
        %v1326 = vpop.f32.mrb[0].mxu0
        %1327 = vmatprep.mubr.bf16.mxu0 0
        %1328 = vmatmul.mubr.bf16.gmra.mrb[0].mxu0 %v1266
        %v1329 = vpop.f32.mrb[0].mxu0
        %v1330 = vadd.f32 0.0, %v1329
        %v1331 = vpop.f32.mrb[0].mxu0
        %v1332 = vpop.f32.mrb[0].mxu0
        %v1333 = vadd.f32 0.0, %v1332
        %v1334 = vpop.f32.mrb[0].mxu0
        %1335 = vdwg.mxu0
        %s1336 = sld [smem:[#allocation2]]
        %v1337 = vstv %s1336
        %v1338 = vmul.f32 %v1337, %v1306
        %v1339 = vmul.f32 %v1337, %v1309
        %v1340 = vmul.f32 %v1337, %v1314
        %v1341 = vmul.f32 %v1337, %v1317
        %v1342 = vmul.f32 %v1337, %v1322
        %v1343 = vmul.f32 %v1337, %v1325
        %v1344 = vmul.f32 %v1337, %v1330
        %v1345 = vmul.f32 %v1337, %v1333
        %v1346 = vadd.f32 %v1338, %v1042
        %v1347 = vadd.f32 %v1339, %v1045
        %v1348 = vadd.f32 %v1340, %v1086
        %v1349 = vadd.f32 %v1341, %v1089
        %v1350 = vadd.f32 %v1342, %v1130
        %v1351 = vadd.f32 %v1343, %v1133
        %v1352 = vadd.f32 %v1344, %v1174
        %v1353 = vadd.f32 %v1345, %v1177
        %v1354 = vadd.f32 %v1346, %v491
        %v1355 = vadd.f32 %v1347, %v494
        %v1356 = vadd.f32 %v1348, %v645
        %v1357 = vadd.f32 %v1349, %v647
        %v1358 = vadd.f32 %v1350, %v651
        %v1359 = vadd.f32 %v1351, %v653
        %v1360 = vadd.f32 %v1352, %v657
        %v1361 = vadd.f32 %v1353, %v659
        %1364 = vrot.lane.b32.xlu0 %v1356, 8
        %v1365 = vpop.permute.xlu0 %1364
        %1366 = vrot.lane.b32.xlu0 %v1357, 8
        %v1367 = vpop.permute.xlu0 %1366
        %1372 = vrot.lane.b32.xlu0 %v1358, 16
        %v1373 = vpop.permute.xlu0 %1372
        %1374 = vrot.lane.b32.xlu0 %v1359, 16
        %v1375 = vpop.permute.xlu0 %1374
        %1380 = vrot.lane.b32.xlu0 %v1360, 24
        %v1381 = vpop.permute.xlu0 %1380
        %1382 = vrot.lane.b32.xlu0 %v1361, 24
        %v1383 = vpop.permute.xlu0 %1382
        %v1386 = vsel %vm722, %v1354, %v1365
        %v1387 = vsel %vm722, %v1355, %v1367
        %v1388 = vsel %vm911, %v1386, %v1373
        %v1389 = vsel %vm911, %v1387, %v1375
        %vm1390 = vcmask 195584
        %v1391 = vsel %vm1390, %v1388, %v1381
        %v1392 = vsel %vm1390, %v1389, %v1383
        %vm1393 = vcmask 261120
        %v1394 = vsel %vm1393, %v1391, 0.0
        %v1395 = vsel %vm1393, %v1392, 0.0
        %v1396 = vunpack.c.l.bf16 %v382
        %v1397 = vunpack.c.l.bf16 %v383
        %v1398 = vadd.f32 %v1396, %v1394
        %v1399 = vadd.f32 %v1397, %v1395
        %v1400 = vpack.c.bf16 %v1399, %v1398
        %v1401 = vld [vmem:[#allocation11] sm:$0xf]
        %v1402 = vld [vmem:[#allocation11 + $0x4] sm:$0xf]
        %v1403 = vld [vmem:[#allocation11 + $0x8] sm:$0xf]
        %v1404 = vld [vmem:[#allocation11 + $0xc] sm:$0xf]
        %v1405 = vld [vmem:[#allocation11 + $0x10] sm:$0xf]
        %v1406 = vld [vmem:[#allocation11 + $0x14] sm:$0xf]
        %v1407 = vld [vmem:[#allocation11 + $0x18] sm:$0xf]
        %v1408 = vld [vmem:[#allocation11 + $0x1c] sm:$0xf]
        %v1409 = vld [vmem:[#allocation11 + $0x20] sm:$0xf]
        %v1410 = vld [vmem:[#allocation11 + $0x24] sm:$0xf]
        %v1411 = vld [vmem:[#allocation11 + $0x28] sm:$0xf]
        %v1412 = vld [vmem:[#allocation11 + $0x2c] sm:$0xf]
        %v1413 = vld [vmem:[#allocation11 + $0x30] sm:$0xf]
        %v1414 = vld [vmem:[#allocation11 + $0x34] sm:$0xf]
        %v1415 = vld [vmem:[#allocation11 + $0x38] sm:$0xf]
        %v1416 = vld [vmem:[#allocation11 + $0x3c] sm:$0xf]
        %v1417 = vld [vmem:[%s6] sm:$0x1]
        %v1419 = vlaneseq
        %v1420 = vshrl.u32 %v1419, 7
        %v1421 = vsub.s32 0, %v1420
        %v1422 = vrot.slane %v1417, %v1421
        %v1440 = vunpack.c.l.b16 %v1401
        %v1441 = vunpack.c.l.b16 %v1402
        %v1442 = vunpack.c.l.b16 %v1403
        %v1443 = vunpack.c.l.b16 %v1404
        %v1444 = vunpack.c.l.b16 %v1405
        %v1445 = vunpack.c.l.b16 %v1406
        %v1446 = vunpack.c.l.b16 %v1407
        %v1447 = vunpack.c.l.b16 %v1408
        %v1448 = vunpack.c.l.b16 %v1409
        %v1449 = vunpack.c.l.b16 %v1410
        %v1450 = vunpack.c.l.b16 %v1411
        %v1451 = vunpack.c.l.b16 %v1412
        %v1452 = vunpack.c.l.b16 %v1413
        %v1453 = vunpack.c.l.b16 %v1414
        %v1454 = vunpack.c.l.b16 %v1415
        %v1455 = vunpack.c.l.b16 %v1416
        %v1456 = vpack.c.b16 %v1441, %v1440
        %v1457 = vpack.c.b16 %v1443, %v1442
        %v1458 = vpack.c.b16 %v1445, %v1444
        %v1459 = vpack.c.b16 %v1447, %v1446
        %v1460 = vpack.c.b16 %v1449, %v1448
        %v1461 = vpack.c.b16 %v1451, %v1450
        %v1462 = vpack.c.b16 %v1453, %v1452
        %v1463 = vpack.c.b16 %v1455, %v1454
        %1472 = vmatprep.subr.bf16.mxu0 0
        %1473 = vmatpush1.bf16.msra.mxu0 %v1456
        %1474 = vmatprep.subr.bf16.mxu0 0
        %1475 = vmatpush1.bf16.msra.mxu0 %v1457
        %1476 = vmatprep.subr.bf16.mxu0 0
        %1477 = vmatpush1.bf16.msra.mxu0 %v1458
        %1478 = vmatprep.subr.bf16.mxu0 0
        %1479 = vmatpush1.bf16.msra.mxu0 %v1459
        %1480 = vmatprep.subr.bf16.mxu0 0
        %1481 = vmatpush1.bf16.msra.mxu0 %v1460
        %1482 = vmatprep.subr.bf16.mxu0 0
        %1483 = vmatpush1.bf16.msra.mxu0 %v1461
        %1484 = vmatprep.subr.bf16.mxu0 0
        %1485 = vmatpush1.bf16.msra.mxu0 %v1462
        %1486 = vmatprep.subr.bf16.mxu0 0
        %1487 = vmatpush1.bf16.msra.mxu0 %v1463
        %1488 = vmatprep.subr.bf16.mxu0 0
        %1489 = vmatpush1.bf16.msra.mxu0 0
        %1490 = vmatprep.subr.bf16.mxu0 0
        %1491 = vmatpush1.bf16.msra.mxu0 0
        %1492 = vmatprep.subr.bf16.mxu0 0
        %1493 = vmatpush1.bf16.msra.mxu0 0
        %1494 = vmatprep.subr.bf16.mxu0 0
        %1495 = vmatpush1.bf16.msra.mxu0 0
        %1496 = vmatprep.subr.bf16.mxu0 0
        %1497 = vmatpush1.bf16.msra.mxu0 0
        %1498 = vmatprep.subr.bf16.mxu0 0
        %1499 = vmatpush1.bf16.msra.mxu0 0
        %1500 = vmatprep.subr.bf16.mxu0 0
        %1501 = vmatpush1.bf16.msra.mxu0 0
        %1502 = vmatprep.subr.bf16.mxu0 0
        %1503 = vmatpush1.bf16.msra.mxu0 0
        %1504 = vmatprep.mubr.bf16.mxu0 0
        %1505 = vmatmul.mubr.bf16.gmra.mrb[0].mxu0 %v1400
        %v1506 = vpop.f32.mrb[0].mxu0
        %v1507 = vadd.f32 %v1422, %v1506
        %v1508 = vpop.f32.mrb[0].mxu0
        %v1509 = vpop.f32.mrb[0].mxu0
        %v1510 = vadd.f32 %v1422, %v1509
        %v1511 = vpop.f32.mrb[0].mxu0
        %1512 = vdwg.mxu0
        %v1513 = vpack.c.bf16 %v1510, %v1507
        %v1515 = vunpack.c.l.b16 %v1513
        %v1516 = vunpack.c.h.b16 %v1513
        %v1517 = vpack.c.b16 %v1515, %v1515
        %v1518 = vpack.c.b16 %v1516, %v1516
        %1521 = vst [vmem:[%s380] sm:$0xf] %v1517
        %1522 = vst [vmem:[%s380 + $0x4] sm:$0xf] %v1518
        %s1523 = sand.u32 %s194, 1
        %s1524 = scalar_lea.sflag [#allocation5], %s1523
        %s1525 = sand.u32 %s194, 1
        %s1526 = smul.addr %s1525, 8
        %s1527 = scalar_lea.vmem [#allocation12], %s1526
        // Predicated region
        $region69: #{tpu_custom_call.1} parent=47 // pred_check
          %p1528 = pneg %p204
        $region70: #{tpu_custom_call.1} parent=47 // pred_check_branch
          %1530 = sbr.rel (%p1528) target = $region72
        $region71: #{tpu_custom_call.1} parent=47 // pred_region
          %s1532 = ssub.s32 128, 128
          %1533 = vsyncadd %s1524, %s1532
          %s1534 = smul.addr %s29, 2
          %s1535 = smul.addr %s1534, 64
          %s1536 = scalar_lea.hbm %s7, %s1535
          %s1537 = sshll.u32 %s1527, 4
          %s1538 = int_to_ptr.vmem [resolvable:$true] %s1537
          %1543 = dma.vmem_to_hbm [thread:$0]  %s1538, 128, %s1536, %s1524, 64, 64, 4
        $region72: #{tpu_custom_call.1} parent=47 // pred_fallthru
          _
      $region48: #{tpu_custom_call.1} parent=5 // pred_fallthru
        _
      %p1544 = scmp.le.s32.totalorder 2, %s24
      // Predicated region
      $region73: #{tpu_custom_call.1} parent=5 // pred_check
        %p1545 = pneg %p1544
      $region74: #{tpu_custom_call.1} parent=5 // pred_check_branch
        %1547 = sbr.rel (%p1545) target = $region76
      $region75: #{tpu_custom_call.1} parent=5 // pred_region
        %s1548 = ssub.s32 %s24, 2
        // Predicated region
        $region77: #{tpu_custom_call.1} parent=75 // pred_check
          %p1549 = pneg %p210
        $region78: #{tpu_custom_call.1} parent=75 // pred_check_branch
          %1551 = sbr.rel (%p1549) target = $region80
        $region79: #{tpu_custom_call.1} parent=75 // pred_region
          %s1552 = sand.u32 %s195, 1
          %s1553 = scalar_lea.sflag [#allocation5], %s1552
          %s1554 = sand.u32 %s195, 1
          %s1555 = smul.addr %s1554, 8
          %s1556 = scalar_lea.vmem [#allocation12], %s1555
          %1557 = dma.done %s1553, 128
        $region80: #{tpu_custom_call.1} parent=75 // pred_fallthru
          _
      $region76: #{tpu_custom_call.1} parent=5 // pred_fallthru
        _
    $region6: #{tpu_custom_call.1} parent=1 // loop_footer
      %s28 = sadd.s32 1, %s24
    $region7: #{tpu_custom_call.1} parent=1 // loop_footer_branch
      %23 = sbr.rel target = $region3
    $region8: #{tpu_custom_call.1} parent=1 // loop_exit
      _
    %1558 = vsyncpa [#allocation4], 1
    %s1559 = scalar_lea.sflag [#allocation4], 1
    %1560 = vsyncpa %s1559, 1
    %1561 = vsyncpa [#allocation7], 1
    %s1562 = scalar_lea.sflag [#allocation7], 1
    %1563 = vsyncpa %s1562, 1
    %1564 = vsyncpa [#allocation10], 1
    %1565 = vsyncpa [#allocation5], 1
    %s1566 = scalar_lea.sflag [#allocation5], 1
    %1567 = vsyncpa %s1566, 1

</llo_original>
